<compile_context>
chip_gen: v5e
topology: v5e:2x2
jax: 0.10.0
libtpu: 0.0.40
codegen_flags: <defaults>
</compile_context>

<pallas_src>
from functools import partial

import jax
import jax.numpy as jnp
from jax.experimental import pallas as pl
from jax.experimental.pallas import tpu as pltpu


def _round_up(a, b):
    return (a + b - 1) // b * b


def _feature_mapping_kernel(x_ref, w1_ref, b1_ref, w2_ref, b2_ref, o_ref, *,
                            transposed):
    # x_ref:  (1, tm, dim)  token tile of one batch element (native dtype)
    # o_ref:  (1, D, tm)    channel-major output tile (lane-dense store)
    x = x_ref[0]                                        # no upcast before MXU

    # ---- Linear(dim -> D) on the MXU, f32 accumulation ----
    h = jnp.dot(x, w1_ref[...], preferred_element_type=jnp.float32)  # (tm, D)

    if transposed:
        # D < 128: do everything after the first matmul in (D, tm) layout so
        # the LN / bias / second matmul are lane-dense and the result is
        # already channel-major (single XLU transpose total, same as before).
        ht = h.T + b1_ref[...]                          # (D, tm) + (D, 1)
        d = ht.shape[0]
        inv_d = 1.0 / d
        # two-pass LayerNorm (numerically matches the PyTorch reference)
        mean = jnp.sum(ht, axis=0, keepdims=True) * inv_d          # (1, tm)
        cent = ht - mean
        var = jnp.sum(cent * cent, axis=0, keepdims=True) * inv_d
        hn = cent * jax.lax.rsqrt(var + 1e-5)           # (D, tm); affine folded

        # 1x1 conv as (D_out, D_in) @ (D_in, tm) -> already output layout
        o = jnp.dot(w2_ref[...], hn, preferred_element_type=jnp.float32)
        o = o + b2_ref[...]                             # (D, tm) + (D, 1)
        o_ref[0] = o.astype(o_ref.dtype)
    else:
        # D >= 128: token-major layout is already lane-dense.
        h = h + b1_ref[...]                             # (tm, D) + (1, D)
        d = h.shape[-1]
        inv_d = 1.0 / d
        mean = jnp.sum(h, axis=-1, keepdims=True) * inv_d
        cent = h - mean
        var = jnp.sum(cent * cent, axis=-1, keepdims=True) * inv_d
        hn = cent * jax.lax.rsqrt(var + 1e-5)

        o = jnp.dot(hn, w2_ref[...], preferred_element_type=jnp.float32)
        o = o + b2_ref[...]                             # (tm, D) + (1, D)
        # single epilogue transpose to channel-major
        o_ref[0] = o.T.astype(o_ref.dtype)


def feature_mapping(x, params, H, W, *, tm=512):
    """x: (B, L, dim) with L == H*W.  Returns (B, D, H, W) NCHW."""
    B, L, dim = x.shape
    assert L == H * W

    w1_t = params["w1_t"]                      # (dim, D) == linear.weight.T
    b1 = params["b1"].reshape(1, -1)           # (1, D)
    gamma = params["gamma"].reshape(1, -1)     # (1, D)
    beta = params["beta"].reshape(1, -1)       # (1, D)
    w2_t = params["w2_t"]                      # (D, D) == conv.weight[:,:,0,0].T
    b2 = params["b2"].reshape(1, -1)           # (1, D)
    D = w1_t.shape[1]

    # Fold LayerNorm's affine into the 1x1 conv (host-side, zero kernel cost).
    w2_eff = gamma.reshape(D, 1) * w2_t        # diag(gamma) @ W2^T  -> (D_in, D_out)
    b2_eff = beta @ w2_t + b2                  # (1, D_out)

    transposed = D < 128
    if transposed:
        w2_k = w2_eff.T                        # (D_out, D_in)
        b2_k = b2_eff.reshape(D, 1)            # (D, 1)
        b1_k = b1.reshape(D, 1)                # (D, 1)
    else:
        w2_k = w2_eff
        b2_k = b2_eff
        b1_k = b1

    # ---- token tile selection: multiple of 128, no host-side pad/slice ----
    if L >= 128:
        tm = max(128, min((tm // 128) * 128, _round_up(L, 128)))
        if L % 128 == 0:
            # prefer a divisor of L -> no ragged/masked edge block at all
            while L % tm != 0:
                tm -= 128
        # v7x has 2 TensorCores: make sure the parallel grid has >= 2 steps
        while B * pl.cdiv(L, tm) < 2 and tm >= 256:
            tm = max(128, (tm // 2) // 128 * 128)
    else:
        tm = L                                  # tiny L: one tile per batch elt
    n_l = pl.cdiv(L, tm)

    # ---- VMEM budget: double-buffered x/out streams + weights + f32 temps ----
    itemsize = jnp.dtype(x.dtype).itemsize
    w_itemsize = jnp.dtype(w1_t.dtype).itemsize
    vmem_est = (2 * (tm * dim + D * tm) * itemsize            # x / out tiles
                + 2 * (dim * D + D * D + 2 * D) * w_itemsize  # weights/biases
                + 4 * tm * D * 4)                             # f32 intermediates
    try:
        info = pltpu.get_tpu_info()
        vmem_cap = int(getattr(info, "vmem_capacity_bytes", 64 * 2 ** 20))
    except Exception:
        vmem_cap = 64 * 2 ** 20                 # conservative (v7x per-TC)
    # ~25% headroom under physical VMEM for Mosaic internal scratch/semaphores.
    vmem_limit = int(min(max(2 * vmem_est, 8 * 2 ** 20), int(vmem_cap * 0.75)))

    grid = (B, n_l)
    kernel = partial(_feature_mapping_kernel, transposed=transposed)

    def _call(single_buffer_weights):
        # Weight/bias operands never change across the grid; single-buffer
        # them to save VMEM (matters most on v7x's 64 MiB).
        extra = ({"pipeline_mode": pl.Buffered(1)}
                 if single_buffer_weights else {})
        in_specs = [
            pl.BlockSpec((1, tm, dim), lambda b, i: (b, i, 0)),          # x tile
            pl.BlockSpec((dim, D), lambda b, i: (0, 0), **extra),        # w1^T
            pl.BlockSpec(b1_k.shape, lambda b, i: (0, 0), **extra),      # b1
            pl.BlockSpec((D, D), lambda b, i: (0, 0), **extra),          # folded w2
            pl.BlockSpec(b2_k.shape, lambda b, i: (0, 0), **extra),      # folded b2
        ]
        return pl.pallas_call(
            kernel,
            out_shape=jax.ShapeDtypeStruct((B, D, L), x.dtype),
            grid_spec=pltpu.PrefetchScalarGridSpec(
                num_scalar_prefetch=0,
                grid=grid,
                in_specs=in_specs,
                out_specs=pl.BlockSpec((1, D, tm), lambda b, i: (b, 0, i)),
            ),
            compiler_params=pltpu.CompilerParams(
                dimension_semantics=("parallel", "parallel"),
                vmem_limit_bytes=vmem_limit),
        )(x, w1_t, b1_k, w2_k, b2_k)

    try:
        out = jax.block_until_ready(_call(True))
    except Exception:
        # Older/stricter compilers may reject Buffered(1); identical math.
        out = jax.block_until_ready(_call(False))

    # Free reshape: output is already channel-major (no XLA transpose needed).
    return out.reshape(B, D, H, W)


def _reference(x, params, H, W):
    """Pure-JAX reference replicating the PyTorch forward exactly."""
    B, L, dim = x.shape
    h = x @ params["w1_t"] + params["b1"]
    mean = jnp.mean(h, axis=-1, keepdims=True)
    var = jnp.mean((h - mean) ** 2, axis=-1, keepdims=True)
    h = (h - mean) / jnp.sqrt(var + 1e-5)
    h = h * params["gamma"] + params["beta"]
    h = h @ params["w2_t"] + params["b2"]
    return h.reshape(B, H, W, -1).transpose(0, 3, 1, 2)


if __name__ == "__main__":
    # Small shapes consistent with the module (patch_size must be 1 for the
    # PyTorch module to be shape-consistent).  L = H*W = 256 -> one full
    # 256-token lane-dense tile per batch element, grid (2, 1) = 2 parallel
    # steps (both v7x TensorCores busy).
    B, H, W = 2, 16, 16
    dim = 32
    in_channel = 8
    patch_size = 1
    D = in_channel * patch_size ** 2
    L = H * W

    key = jax.random.PRNGKey(0)
    kx, k1, k2, k3, k4, k5, k6 = jax.random.split(key, 7)

    x = jax.random.normal(kx, (B, L, dim), dtype=jnp.float32)

    params = {
        "w1_t": jax.random.normal(k1, (dim, D), dtype=jnp.float32) * 0.05,
        "b1": jax.random.normal(k2, (1, D), dtype=jnp.float32) * 0.01,
        "gamma": 1.0 + 0.1 * jax.random.normal(k5, (1, D), dtype=jnp.float32),
        "beta": 0.05 * jax.random.normal(k6, (1, D), dtype=jnp.float32),
        "w2_t": jax.random.normal(k3, (D, D), dtype=jnp.float32) * 0.1,
        "b2": jax.random.normal(k4, (1, D), dtype=jnp.float32) * 0.01,
    }

    out = feature_mapping(x, params, H, W)
    out = jax.block_until_ready(out)

    ref = _reference(x, params, H, W)
    assert out.shape == (B, D, H, W), out.shape
    assert jnp.allclose(out, ref, atol=1e-4, rtol=1e-4), (
        float(jnp.max(jnp.abs(out - ref))))

    print("KERNEL_OK")
</pallas_src>

<mosaic_0001>
module attributes {stable_mosaic.version = 11 : i64} {
  func.func @_feature_mapping_kernel(%arg0: i32, %arg1: i32, %arg2: memref<1x256x32xf32, #tpu.memory_space<vmem>>, %arg3: memref<32x8xf32, #tpu.memory_space<vmem>>, %arg4: memref<8x1xf32, #tpu.memory_space<vmem>>, %arg5: memref<8x8xf32, #tpu.memory_space<vmem>>, %arg6: memref<8x1xf32, #tpu.memory_space<vmem>>, %arg7: memref<1x8x256xf32, #tpu.memory_space<vmem>>) attributes {dimension_semantics = [#tpu.dimension_semantics<parallel>, #tpu.dimension_semantics<parallel>], iteration_bounds = array<i64: 2, 1>, scalar_prefetch = 0 : i64, scratch_operands = 0 : i64, tpu.core_type = #tpu.core_type<tc>, window_params = [{transform_indices = @transform_0, window_bounds = array<i64: 1, 256, 32>}, {pipeline_mode = #tpu.pipeline_mode<synchronous>, transform_indices = @transform_1, window_bounds = array<i64: 32, 8>}, {pipeline_mode = #tpu.pipeline_mode<synchronous>, transform_indices = @transform_2, window_bounds = array<i64: 8, 1>}, {pipeline_mode = #tpu.pipeline_mode<synchronous>, transform_indices = @transform_3, window_bounds = array<i64: 8, 8>}, {pipeline_mode = #tpu.pipeline_mode<synchronous>, transform_indices = @transform_4, window_bounds = array<i64: 8, 1>}, {transform_indices = @transform_5, window_bounds = array<i64: 1, 8, 256>}]} {
    %c0 = arith.constant 0 : index
    %c0_0 = arith.constant 0 : index
    %c0_1 = arith.constant 0 : index
    %0 = vector.load %arg2[%c0, %c0_0, %c0_1] : memref<1x256x32xf32, #tpu.memory_space<vmem>>, vector<1x256x32xf32>
    %1 = vector.shape_cast %0 : vector<1x256x32xf32> to vector<256x32xf32>
    %c0_2 = arith.constant 0 : index
    %c0_3 = arith.constant 0 : index
    %2 = vector.load %arg3[%c0_2, %c0_3] : memref<32x8xf32, #tpu.memory_space<vmem>>, vector<32x8xf32>
    %cst = arith.constant dense<0.000000e+00> : vector<256x8xf32>
    %3 = tpu.matmul %1, %2, %cst {dimension_numbers = #tpu.dot_dimension_numbers<[1], [0], [0], [1], [0, 0, 1, 1], [], []>} : vector<256x32xf32>, vector<32x8xf32>, vector<256x8xf32> -> vector<256x8xf32>
    %4 = tpu.transpose %3, [1, 0] : vector<256x8xf32> -> vector<8x256xf32>
    %c0_4 = arith.constant 0 : index
    %c0_5 = arith.constant 0 : index
    %5 = vector.load %arg4[%c0_4, %c0_5] : memref<8x1xf32, #tpu.memory_space<vmem>>, vector<8x1xf32>
    %6 = vector.broadcast %5 : vector<8x1xf32> to vector<8x256xf32>
    %7 = arith.addf %4, %6 : vector<8x256xf32>
    %cst_6 = arith.constant dense<0.000000e+00> : vector<256xf32>
    %8 = vector.multi_reduction <add>, %7, %cst_6 [0] : vector<8x256xf32> to vector<256xf32>
    %9 = vector.shape_cast %8 : vector<256xf32> to vector<1x256xf32>
    %cst_7 = arith.constant 1.250000e-01 : f32
    %10 = vector.broadcast %cst_7 : f32 to vector<1x256xf32>
    %11 = arith.mulf %9, %10 : vector<1x256xf32>
    %12 = vector.broadcast %11 : vector<1x256xf32> to vector<8x256xf32>
    %13 = arith.subf %7, %12 : vector<8x256xf32>
    %14 = arith.mulf %13, %13 : vector<8x256xf32>
    %cst_8 = arith.constant dense<0.000000e+00> : vector<256xf32>
    %15 = vector.multi_reduction <add>, %14, %cst_8 [0] : vector<8x256xf32> to vector<256xf32>
    %16 = vector.shape_cast %15 : vector<256xf32> to vector<1x256xf32>
    %cst_9 = arith.constant 1.250000e-01 : f32
    %17 = vector.broadcast %cst_9 : f32 to vector<1x256xf32>
    %18 = arith.mulf %16, %17 : vector<1x256xf32>
    %cst_10 = arith.constant 9.99999974E-6 : f32
    %19 = vector.broadcast %cst_10 : f32 to vector<1x256xf32>
    %20 = arith.addf %18, %19 : vector<1x256xf32>
    %21 = math.rsqrt %20 : vector<1x256xf32>
    %22 = vector.broadcast %21 : vector<1x256xf32> to vector<8x256xf32>
    %23 = arith.mulf %13, %22 : vector<8x256xf32>
    %c0_11 = arith.constant 0 : index
    %c0_12 = arith.constant 0 : index
    %24 = vector.load %arg5[%c0_11, %c0_12] : memref<8x8xf32, #tpu.memory_space<vmem>>, vector<8x8xf32>
    %cst_13 = arith.constant dense<0.000000e+00> : vector<8x256xf32>
    %25 = tpu.matmul %24, %23, %cst_13 {dimension_numbers = #tpu.dot_dimension_numbers<[1], [0], [0], [1], [0, 0, 1, 1], [], []>} : vector<8x8xf32>, vector<8x256xf32>, vector<8x256xf32> -> vector<8x256xf32>
    %c0_14 = arith.constant 0 : index
    %c0_15 = arith.constant 0 : index
    %26 = vector.load %arg6[%c0_14, %c0_15] : memref<8x1xf32, #tpu.memory_space<vmem>>, vector<8x1xf32>
    %27 = vector.broadcast %26 : vector<8x1xf32> to vector<8x256xf32>
    %28 = arith.addf %25, %27 : vector<8x256xf32>
    %c0_16 = arith.constant 0 : index
    %c0_17 = arith.constant 0 : index
    %c0_18 = arith.constant 0 : index
    %29 = vector.load %arg7[%c0_16, %c0_17, %c0_18] : memref<1x8x256xf32, #tpu.memory_space<vmem>>, vector<1x8x256xf32>
    %30 = vector.shape_cast %29 : vector<1x8x256xf32> to vector<8x256xf32>
    %31 = vector.shape_cast %28 : vector<8x256xf32> to vector<1x8x256xf32>
    tpu.vector_store %arg7[%c0_16, %c0_17, %c0_18], %31 {strides = array<i32>} : memref<1x8x256xf32, #tpu.memory_space<vmem>>, vector<1x8x256xf32>,
    return
  }
  func.func @transform_0(%arg0: i32, %arg1: i32) -> (i32, i32, i32) {
    %c0_i32 = arith.constant 0 : i32
    %c0_i32_0 = arith.constant 0 : i32
    return %arg0, %arg1, %c0_i32 : i32, i32, i32
  }
  func.func @transform_1(%arg0: i32, %arg1: i32) -> (i32, i32) {
    %c0_i32 = arith.constant 0 : i32
    %c0_i32_0 = arith.constant 0 : i32
    %c0_i32_1 = arith.constant 0 : i32
    return %c0_i32, %c0_i32_0 : i32, i32
  }
  func.func @transform_2(%arg0: i32, %arg1: i32) -> (i32, i32) {
    %c0_i32 = arith.constant 0 : i32
    %c0_i32_0 = arith.constant 0 : i32
    %c0_i32_1 = arith.constant 0 : i32
    return %c0_i32, %c0_i32_0 : i32, i32
  }
  func.func @transform_3(%arg0: i32, %arg1: i32) -> (i32, i32) {
    %c0_i32 = arith.constant 0 : i32
    %c0_i32_0 = arith.constant 0 : i32
    %c0_i32_1 = arith.constant 0 : i32
    return %c0_i32, %c0_i32_0 : i32, i32
  }
  func.func @transform_4(%arg0: i32, %arg1: i32) -> (i32, i32) {
    %c0_i32 = arith.constant 0 : i32
    %c0_i32_0 = arith.constant 0 : i32
    %c0_i32_1 = arith.constant 0 : i32
    return %c0_i32, %c0_i32_0 : i32, i32
  }
  func.func @transform_5(%arg0: i32, %arg1: i32) -> (i32, i32, i32) {
    %c0_i32 = arith.constant 0 : i32
    %c0_i32_0 = arith.constant 0 : i32
    return %arg0, %c0_i32, %arg1 : i32, i32, i32
  }
}

module attributes {stable_mosaic.version = 11 : i64} {
  func.func @_feature_mapping_kernel(%arg0: i32, %arg1: i32, %arg2: memref<1x256x32xf32, #tpu.memory_space<vmem>>, %arg3: memref<32x8xf32, #tpu.memory_space<vmem>>, %arg4: memref<8x1xf32, #tpu.memory_space<vmem>>, %arg5: memref<8x8xf32, #tpu.memory_space<vmem>>, %arg6: memref<8x1xf32, #tpu.memory_space<vmem>>, %arg7: memref<1x8x256xf32, #tpu.memory_space<vmem>>) attributes {dimension_semantics = [#tpu.dimension_semantics<parallel>, #tpu.dimension_semantics<parallel>], iteration_bounds = array<i64: 2, 1>, scalar_prefetch = 0 : i64, scratch_operands = 0 : i64, tpu.core_type = #tpu.core_type<tc>, window_params = [{transform_indices = @transform_0, window_bounds = array<i64: 1, 256, 32>}, {pipeline_mode = #tpu.pipeline_mode<synchronous>, transform_indices = @transform_1, window_bounds = array<i64: 32, 8>}, {pipeline_mode = #tpu.pipeline_mode<synchronous>, transform_indices = @transform_2, window_bounds = array<i64: 8, 1>}, {pipeline_mode = #tpu.pipeline_mode<synchronous>, transform_indices = @transform_3, window_bounds = array<i64: 8, 8>}, {pipeline_mode = #tpu.pipeline_mode<synchronous>, transform_indices = @transform_4, window_bounds = array<i64: 8, 1>}, {transform_indices = @transform_5, window_bounds = array<i64: 1, 8, 256>}]} {
    %c0 = arith.constant 0 : index
    %c0_0 = arith.constant 0 : index
    %c0_1 = arith.constant 0 : index
    %0 = vector.load %arg2[%c0, %c0_0, %c0_1] : memref<1x256x32xf32, #tpu.memory_space<vmem>>, vector<1x256x32xf32>
    %1 = vector.shape_cast %0 : vector<1x256x32xf32> to vector<256x32xf32>
    %c0_2 = arith.constant 0 : index
    %c0_3 = arith.constant 0 : index
    %2 = vector.load %arg3[%c0_2, %c0_3] : memref<32x8xf32, #tpu.memory_space<vmem>>, vector<32x8xf32>
    %cst = arith.constant dense<0.000000e+00> : vector<256x8xf32>
    %3 = tpu.matmul %1, %2, %cst {dimension_numbers = #tpu.dot_dimension_numbers<[1], [0], [0], [1], [0, 0, 1, 1], [], []>} : vector<256x32xf32>, vector<32x8xf32>, vector<256x8xf32> -> vector<256x8xf32>
    %4 = tpu.transpose %3, [1, 0] : vector<256x8xf32> -> vector<8x256xf32>
    %c0_4 = arith.constant 0 : index
    %c0_5 = arith.constant 0 : index
    %5 = vector.load %arg4[%c0_4, %c0_5] : memref<8x1xf32, #tpu.memory_space<vmem>>, vector<8x1xf32>
    %6 = vector.broadcast %5 : vector<8x1xf32> to vector<8x256xf32>
    %7 = arith.addf %4, %6 : vector<8x256xf32>
    %cst_6 = arith.constant dense<0.000000e+00> : vector<256xf32>
    %8 = vector.multi_reduction <add>, %7, %cst_6 [0] : vector<8x256xf32> to vector<256xf32>
    %9 = vector.shape_cast %8 : vector<256xf32> to vector<1x256xf32>
    %cst_7 = arith.constant 1.250000e-01 : f32
    %10 = vector.broadcast %cst_7 : f32 to vector<1x256xf32>
    %11 = arith.mulf %9, %10 : vector<1x256xf32>
    %12 = vector.broadcast %11 : vector<1x256xf32> to vector<8x256xf32>
    %13 = arith.subf %7, %12 : vector<8x256xf32>
    %14 = arith.mulf %13, %13 : vector<8x256xf32>
    %cst_8 = arith.constant dense<0.000000e+00> : vector<256xf32>
    %15 = vector.multi_reduction <add>, %14, %cst_8 [0] : vector<8x256xf32> to vector<256xf32>
    %16 = vector.shape_cast %15 : vector<256xf32> to vector<1x256xf32>
    %cst_9 = arith.constant 1.250000e-01 : f32
    %17 = vector.broadcast %cst_9 : f32 to vector<1x256xf32>
    %18 = arith.mulf %16, %17 : vector<1x256xf32>
    %cst_10 = arith.constant 9.99999974E-6 : f32
    %19 = vector.broadcast %cst_10 : f32 to vector<1x256xf32>
    %20 = arith.addf %18, %19 : vector<1x256xf32>
    %21 = math.rsqrt %20 : vector<1x256xf32>
    %22 = vector.broadcast %21 : vector<1x256xf32> to vector<8x256xf32>
    %23 = arith.mulf %13, %22 : vector<8x256xf32>
    %c0_11 = arith.constant 0 : index
    %c0_12 = arith.constant 0 : index
    %24 = vector.load %arg5[%c0_11, %c0_12] : memref<8x8xf32, #tpu.memory_space<vmem>>, vector<8x8xf32>
    %cst_13 = arith.constant dense<0.000000e+00> : vector<8x256xf32>
    %25 = tpu.matmul %24, %23, %cst_13 {dimension_numbers = #tpu.dot_dimension_numbers<[1], [0], [0], [1], [0, 0, 1, 1], [], []>} : vector<8x8xf32>, vector<8x256xf32>, vector<8x256xf32> -> vector<8x256xf32>
    %c0_14 = arith.constant 0 : index
    %c0_15 = arith.constant 0 : index
    %26 = vector.load %arg6[%c0_14, %c0_15] : memref<8x1xf32, #tpu.memory_space<vmem>>, vector<8x1xf32>
    %27 = vector.broadcast %26 : vector<8x1xf32> to vector<8x256xf32>
    %28 = arith.addf %25, %27 : vector<8x256xf32>
    %c0_16 = arith.constant 0 : index
    %c0_17 = arith.constant 0 : index
    %c0_18 = arith.constant 0 : index
    %29 = vector.load %arg7[%c0_16, %c0_17, %c0_18] : memref<1x8x256xf32, #tpu.memory_space<vmem>>, vector<1x8x256xf32>
    %30 = vector.shape_cast %29 : vector<1x8x256xf32> to vector<8x256xf32>
    %31 = vector.shape_cast %28 : vector<8x256xf32> to vector<1x8x256xf32>
    tpu.vector_store %arg7[%c0_16, %c0_17, %c0_18], %31 {strides = array<i32>} : memref<1x8x256xf32, #tpu.memory_space<vmem>>, vector<1x8x256xf32>,
    return
  }
  func.func @transform_0(%arg0: i32, %arg1: i32) -> (i32, i32, i32) {
    %c0_i32 = arith.constant 0 : i32
    %c0_i32_0 = arith.constant 0 : i32
    return %arg0, %arg1, %c0_i32 : i32, i32, i32
  }
  func.func @transform_1(%arg0: i32, %arg1: i32) -> (i32, i32) {
    %c0_i32 = arith.constant 0 : i32
    %c0_i32_0 = arith.constant 0 : i32
    %c0_i32_1 = arith.constant 0 : i32
    return %c0_i32, %c0_i32_0 : i32, i32
  }
  func.func @transform_2(%arg0: i32, %arg1: i32) -> (i32, i32) {
    %c0_i32 = arith.constant 0 : i32
    %c0_i32_0 = arith.constant 0 : i32
    %c0_i32_1 = arith.constant 0 : i32
    return %c0_i32, %c0_i32_0 : i32, i32
  }
  func.func @transform_3(%arg0: i32, %arg1: i32) -> (i32, i32) {
    %c0_i32 = arith.constant 0 : i32
    %c0_i32_0 = arith.constant 0 : i32
    %c0_i32_1 = arith.constant 0 : i32
    return %c0_i32, %c0_i32_0 : i32, i32
  }
  func.func @transform_4(%arg0: i32, %arg1: i32) -> (i32, i32) {
    %c0_i32 = arith.constant 0 : i32
    %c0_i32_0 = arith.constant 0 : i32
    %c0_i32_1 = arith.constant 0 : i32
    return %c0_i32, %c0_i32_0 : i32, i32
  }
  func.func @transform_5(%arg0: i32, %arg1: i32) -> (i32, i32, i32) {
    %c0_i32 = arith.constant 0 : i32
    %c0_i32_0 = arith.constant 0 : i32
    return %arg0, %c0_i32, %arg1 : i32, i32, i32
  }
}

</mosaic_0001>

<llo_original>
// kernel: tpu_custom_call.1
$region0: #{tpu_custom_call.1}
  #allocation0 [shape = 'u32[]', space=smem, size = 0x4, offset = 0x4, fixed_abs, tag = 'smem constant byte address 0x4 - core index']
  #allocation1 [shape = 'u32[72,128]{1,0:T(1,128)}', space=vmem, size = 0x9000, scoped, tag = 'internal scratch']
  %s0 = inlined_call_operand.vmem [shape: f32[2,256,32], index: 0, kind: input, shape index: {}]
  %s1 = inlined_call_operand.vmem [shape: f32[32,8], index: 1, kind: input, shape index: {}]
  %s2 = inlined_call_operand.vmem [shape: f32[8,1], index: 2, kind: input, shape index: {}]
  %s3 = inlined_call_operand.vmem [shape: f32[8,8], index: 3, kind: input, shape index: {}]
  %s4 = inlined_call_operand.vmem [shape: f32[8,1], index: 4, kind: input, shape index: {}]
  %s5 = inlined_call_operand.hbm [shape: f32[2,8,256], index: 5, kind: output, shape index: {}]
  %s6 = sld [smem:[#allocation0]]
  $region53: #{tpu_custom_call.1} parent=0
    _
  %s8 = ssub.s32 1, %s6
  %s9 = scalar_select 0, %s8, %s6
  $region1: #{tpu_custom_call.1} parent=0
    #allocation2 [shape = 'u8[16384]{0}', space=vmem, size = 0x4000, scoped, tag = 'output window, operand 0']
    #allocation3 [shape = 's32[2]{0}', space=sflag, size = 0x8, scoped, tag = 'scoped memory for tpu_custom_call.1']
    %10 = vsyncpa [#allocation3], 0
    %s11 = scalar_lea.sflag [#allocation3], 1
    %12 = vsyncpa %s11, 0
    loop: start=0, step=1, limit=4
    $region2: #{tpu_custom_call.1} parent=1 // loop_pre_header
      _
    $region3: #{tpu_custom_call.1} parent=1 // loop_header
      %s14 = sphi 0, %s18
      %p15 = scmp.ge.s32.totalorder %s14, 4
      %s21 = sphi 0, %s33
      %s22 = sphi 0, %s29
      %s23 = sphi 0, %s21
      %s24 = sphi 0, %s22
      %s25 = sphi 0, %s23
      %s26 = sphi 0, %s24
      %s38 = sphi 0, %s40
      %s41 = sphi 0, %s38
      %s42 = sphi 0, %s41
      %s58 = sphi 0, %s42
      %s62 = sphi 0, %s62
      %s64 = sphi 0, %s62
      %s65 = sphi 0, %s64
      %s79 = sphi 0, %s65
      %s83 = sphi 0, %s83
      %s85 = sphi 0, %s83
      %s86 = sphi 0, %s85
      %s100 = sphi 0, %s86
      %s104 = sphi 0, %s104
      %s106 = sphi 0, %s104
      %s107 = sphi 0, %s106
      %s121 = sphi 0, %s107
      %s125 = sphi 0, %s125
      %s127 = sphi 0, %s125
      %s128 = sphi 0, %s127
      %s142 = sphi 0, %s128
      %s150 = sphi 0, %s152
      %s153 = sphi 0, %s150
      %s154 = sphi 0, %s153
      %s170 = sphi 0, %s154
    $region4: #{tpu_custom_call.1} parent=1 // loop_header_branch
      %17 = sbr.rel (%p15) target = $region8
    $region5: #{tpu_custom_call.1} parent=1 // loop_body
      %s19 = ssub.s32 %s14, 1
      %s20 = ssub.s32 %s14, 2
      %s27 = sadd.s32 1, %s22
      %p28 = scmp.ge.s32.totalorder %s27, 1
      %s29 = scalar_select %p28, 0, %s27
      %s30 = sadd.s32 1, %s21
      %s31 = scalar_select %p28, %s30, %s21
      %p32 = scmp.ge.s32.totalorder %s31, 2
      %s33 = scalar_select %p32, 0, %s31
      %s34 = ssub.s32 %s21, %s33
      %s35 = ssub.s32 %s22, %s29
      %s36 = sor.u32 %s34, %s35
      %p37 = scmp.eq.s32.totalorder %s36, 0
      %s39 = sadd.s32 %s38, 1
      %s40 = scalar_select %p37, %s38, %s39
      %p43 = pneg %p37
      %p44 = scmp.eq.s32.totalorder %s14, 1
      %p45 = por %p43, %p44
      %p46 = scmp.ne.s32.totalorder %s38, %s41
      %p47 = scmp.eq.s32.totalorder %s14, 0
      %p48 = por %p46, %p47
      %p49 = scmp.ne.s32.totalorder %s38, %s41
      %p50 = scmp.eq.s32.totalorder %s19, 1
      %p51 = por %p49, %p50
      %p52 = scmp.ne.s32.totalorder %s41, %s42
      %p53 = scmp.eq.s32.totalorder %s19, 0
      %p54 = por %p52, %p53
      %p55 = scmp.ne.s32.totalorder %s41, %s42
      %p56 = scmp.eq.s32.totalorder %s20, 1
      %p57 = por %p55, %p56
      %p59 = scmp.ne.s32.totalorder %s42, %s58
      %p60 = scmp.eq.s32.totalorder %s20, 0
      %p61 = por %p59, %p60
      %s63 = sadd.s32 %s62, 1
      %p66 = scmp.eq.s32.totalorder %s14, 1
      %p67 = scmp.ne.s32.totalorder %s62, %s64
      %p68 = scmp.eq.s32.totalorder %s14, 0
      %p69 = por %p67, %p68
      %p70 = scmp.ne.s32.totalorder %s62, %s64
      %p71 = scmp.eq.s32.totalorder %s19, 1
      %p72 = por %p70, %p71
      %p73 = scmp.ne.s32.totalorder %s64, %s65
      %p74 = scmp.eq.s32.totalorder %s19, 0
      %p75 = por %p73, %p74
      %p76 = scmp.ne.s32.totalorder %s64, %s65
      %p77 = scmp.eq.s32.totalorder %s20, 1
      %p78 = por %p76, %p77
      %p80 = scmp.ne.s32.totalorder %s65, %s79
      %p81 = scmp.eq.s32.totalorder %s20, 0
      %p82 = por %p80, %p81
      %s84 = sadd.s32 %s83, 1
      %p87 = scmp.eq.s32.totalorder %s14, 1
      %p88 = scmp.ne.s32.totalorder %s83, %s85
      %p89 = scmp.eq.s32.totalorder %s14, 0
      %p90 = por %p88, %p89
      %p91 = scmp.ne.s32.totalorder %s83, %s85
      %p92 = scmp.eq.s32.totalorder %s19, 1
      %p93 = por %p91, %p92
      %p94 = scmp.ne.s32.totalorder %s85, %s86
      %p95 = scmp.eq.s32.totalorder %s19, 0
      %p96 = por %p94, %p95
      %p97 = scmp.ne.s32.totalorder %s85, %s86
      %p98 = scmp.eq.s32.totalorder %s20, 1
      %p99 = por %p97, %p98
      %p101 = scmp.ne.s32.totalorder %s86, %s100
      %p102 = scmp.eq.s32.totalorder %s20, 0
      %p103 = por %p101, %p102
      %s105 = sadd.s32 %s104, 1
      %p108 = scmp.eq.s32.totalorder %s14, 1
      %p109 = scmp.ne.s32.totalorder %s104, %s106
      %p110 = scmp.eq.s32.totalorder %s14, 0
      %p111 = por %p109, %p110
      %p112 = scmp.ne.s32.totalorder %s104, %s106
      %p113 = scmp.eq.s32.totalorder %s19, 1
      %p114 = por %p112, %p113
      %p115 = scmp.ne.s32.totalorder %s106, %s107
      %p116 = scmp.eq.s32.totalorder %s19, 0
      %p117 = por %p115, %p116
      %p118 = scmp.ne.s32.totalorder %s106, %s107
      %p119 = scmp.eq.s32.totalorder %s20, 1
      %p120 = por %p118, %p119
      %p122 = scmp.ne.s32.totalorder %s107, %s121
      %p123 = scmp.eq.s32.totalorder %s20, 0
      %p124 = por %p122, %p123
      %s126 = sadd.s32 %s125, 1
      %p129 = scmp.eq.s32.totalorder %s14, 1
      %p130 = scmp.ne.s32.totalorder %s125, %s127
      %p131 = scmp.eq.s32.totalorder %s14, 0
      %p132 = por %p130, %p131
      %p133 = scmp.ne.s32.totalorder %s125, %s127
      %p134 = scmp.eq.s32.totalorder %s19, 1
      %p135 = por %p133, %p134
      %p136 = scmp.ne.s32.totalorder %s127, %s128
      %p137 = scmp.eq.s32.totalorder %s19, 0
      %p138 = por %p136, %p137
      %p139 = scmp.ne.s32.totalorder %s127, %s128
      %p140 = scmp.eq.s32.totalorder %s20, 1
      %p141 = por %p139, %p140
      %p143 = scmp.ne.s32.totalorder %s128, %s142
      %p144 = scmp.eq.s32.totalorder %s20, 0
      %p145 = por %p143, %p144
      %s146 = ssub.s32 %s21, %s33
      %s147 = ssub.s32 %s22, %s29
      %s148 = sor.u32 %s146, %s147
      %p149 = scmp.eq.s32.totalorder %s148, 0
      %s151 = sadd.s32 %s150, 1
      %s152 = scalar_select %p149, %s150, %s151
      %p155 = pneg %p149
      %p156 = scmp.eq.s32.totalorder %s14, 1
      %p157 = por %p155, %p156
      %p158 = scmp.ne.s32.totalorder %s150, %s153
      %p159 = scmp.eq.s32.totalorder %s14, 0
      %p160 = por %p158, %p159
      %p161 = scmp.ne.s32.totalorder %s150, %s153
      %p162 = scmp.eq.s32.totalorder %s19, 1
      %p163 = por %p161, %p162
      %p164 = scmp.ne.s32.totalorder %s153, %s154
      %p165 = scmp.eq.s32.totalorder %s19, 0
      %p166 = por %p164, %p165
      %p167 = scmp.ne.s32.totalorder %s153, %s154
      %p168 = scmp.eq.s32.totalorder %s20, 1
      %p169 = por %p167, %p168
      %p171 = scmp.ne.s32.totalorder %s154, %s170
      %p172 = scmp.eq.s32.totalorder %s20, 0
      %p173 = por %p171, %p172
      %p174 = scmp.le.s32.totalorder 1, %s14
      %p175 = scmp.lt.s32.totalorder %s14, 3
      %p176 = pnand %p174, %p175
      %p177 = pneg %p176
      // Predicated region
      $region9: #{tpu_custom_call.1} parent=5 // pred_check
        _
      $region10: #{tpu_custom_call.1} parent=5 // pred_check_branch
        %179 = sbr.rel (%p176) target = $region12
      $region11: #{tpu_custom_call.1} parent=5 // pred_region
        %s180 = ssub.s32 %s14, 1
        // Predicated region
        $region13: #{tpu_custom_call.1} parent=11 // pred_check
          %p181 = pneg %p75
        $region14: #{tpu_custom_call.1} parent=11 // pred_check_branch
          %183 = sbr.rel (%p181) target = $region16
        $region15: #{tpu_custom_call.1} parent=11 // pred_region
          _
        $region16: #{tpu_custom_call.1} parent=11 // pred_fallthru
          _
        // Predicated region
        $region17: #{tpu_custom_call.1} parent=11 // pred_check
          %p184 = pneg %p96
        $region18: #{tpu_custom_call.1} parent=11 // pred_check_branch
          %186 = sbr.rel (%p184) target = $region20
        $region19: #{tpu_custom_call.1} parent=11 // pred_region
          _
        $region20: #{tpu_custom_call.1} parent=11 // pred_fallthru
          _
        // Predicated region
        $region21: #{tpu_custom_call.1} parent=11 // pred_check
          %p187 = pneg %p117
        $region22: #{tpu_custom_call.1} parent=11 // pred_check_branch
          %189 = sbr.rel (%p187) target = $region24
        $region23: #{tpu_custom_call.1} parent=11 // pred_region
          _
        $region24: #{tpu_custom_call.1} parent=11 // pred_fallthru
          _
        // Predicated region
        $region25: #{tpu_custom_call.1} parent=11 // pred_check
          %p190 = pneg %p138
        $region26: #{tpu_custom_call.1} parent=11 // pred_check_branch
          %192 = sbr.rel (%p190) target = $region28
        $region27: #{tpu_custom_call.1} parent=11 // pred_region
          _
        $region28: #{tpu_custom_call.1} parent=11 // pred_fallthru
          _
      $region12: #{tpu_custom_call.1} parent=5 // pred_fallthru
        _
      %p193 = scmp.lt.s32.totalorder %s14, 2
      // Predicated region
      $region29: #{tpu_custom_call.1} parent=5 // pred_check
        %p194 = pneg %p193
      $region30: #{tpu_custom_call.1} parent=5 // pred_check_branch
        %196 = sbr.rel (%p194) target = $region32
      $region31: #{tpu_custom_call.1} parent=5 // pred_region
        // Predicated region
        $region33: #{tpu_custom_call.1} parent=31 // pred_check
          %p197 = pneg %p48
        $region34: #{tpu_custom_call.1} parent=31 // pred_check_branch
          %199 = sbr.rel (%p197) target = $region36
        $region35: #{tpu_custom_call.1} parent=31 // pred_region
          %s200 = smul.u32 32, %s22
          %p201 = scmp.lt.s32.totalorder %s21, 1
          %s202 = scalar_select %p201, %s21, 1
          %p203 = scmp.lt.s32.totalorder %s200, 31
          %s204 = scalar_select %p203, %s200, 31
          %s205 = smul.addr %s202, 32
          %s206 = sadd.s32 %s204, %s205
          %s207 = smul.addr %s206, 8
          %s208 = scalar_lea.vmem %s0, %s207
          %s209 = smul.u32 32, %s22
        $region36: #{tpu_custom_call.1} parent=31 // pred_fallthru
          _
      $region32: #{tpu_custom_call.1} parent=5 // pred_fallthru
        _
      %p210 = scmp.le.s32.totalorder 1, %s14
      %p211 = scmp.lt.s32.totalorder %s14, 3
      %p212 = pnand %p210, %p211
      %p213 = pneg %p212
      // Predicated region
      $region37: #{tpu_custom_call.1} parent=5 // pred_check
        _
      $region38: #{tpu_custom_call.1} parent=5 // pred_check_branch
        %215 = sbr.rel (%p212) target = $region40
      $region39: #{tpu_custom_call.1} parent=5 // pred_region
        %s216 = ssub.s32 %s14, 1
        %s217 = smul.u32 32, %s24
        %p218 = scmp.lt.s32.totalorder %s23, 1
        %s219 = scalar_select %p218, %s23, 1
        %p220 = scmp.lt.s32.totalorder %s217, 31
        %s221 = scalar_select %p220, %s217, 31
        %s222 = smul.addr %s219, 32
        %s223 = sadd.s32 %s221, %s222
        %s224 = smul.addr %s223, 8
        %s225 = scalar_lea.vmem %s0, %s224
        %p226 = pneg %p54
        %p227 = pneg %p51
        %p228 = pneg %p75
        %p229 = pneg %p72
        %p230 = pneg %p96
        %p231 = pneg %p93
        %p232 = pneg %p117
        %p233 = pneg %p114
        %p234 = pneg %p138
        %p235 = pneg %p135
        %p236 = pneg %p166
        %p237 = pneg %p163
        %s238 = sand.u32 %s153, 1
        %s239 = scalar_lea.sflag [#allocation3], %s238
        %s240 = sand.u32 %s153, 1
        %s241 = smul.addr %s240, 16
        %s242 = scalar_lea.vmem [#allocation2], %s241
        %s243 = smul.u32 32, %s24
        %p244 = scmp.lt.s32.totalorder %s23, 1
        %s245 = scalar_select %p244, %s23, 1
        %p246 = scmp.lt.s32.totalorder %s243, 31
        %s247 = scalar_select %p246, %s243, 31
        %s248 = smul.addr %s245, 32
        %s249 = sadd.s32 %s247, %s248
        %s250 = smul.addr %s249, 8
        %s251 = scalar_lea.vmem %s0, %s250
        %s252 = smul.u32 32, %s24
        %s253 = smul.u32 2, %s24
        %v254 = vld [vmem:[%s251] sm:$0xff]
        %v255 = vld [vmem:[%s251 + $0x8] sm:$0xff]
        %v256 = vld [vmem:[%s251 + $0x10] sm:$0xff]
        %v257 = vld [vmem:[%s251 + $0x18] sm:$0xff]
        %v258 = vld [vmem:[%s251 + $0x20] sm:$0xff]
        %v259 = vld [vmem:[%s251 + $0x28] sm:$0xff]
        %v260 = vld [vmem:[%s251 + $0x30] sm:$0xff]
        %v261 = vld [vmem:[%s251 + $0x38] sm:$0xff]
        %v262 = vld [vmem:[%s251 + $0x40] sm:$0xff]
        %v263 = vld [vmem:[%s251 + $0x48] sm:$0xff]
        %v264 = vld [vmem:[%s251 + $0x50] sm:$0xff]
        %v265 = vld [vmem:[%s251 + $0x58] sm:$0xff]
        %v266 = vld [vmem:[%s251 + $0x60] sm:$0xff]
        %v267 = vld [vmem:[%s251 + $0x68] sm:$0xff]
        %v268 = vld [vmem:[%s251 + $0x70] sm:$0xff]
        %v269 = vld [vmem:[%s251 + $0x78] sm:$0xff]
        %v270 = vld [vmem:[%s251 + $0x80] sm:$0xff]
        %v271 = vld [vmem:[%s251 + $0x88] sm:$0xff]
        %v272 = vld [vmem:[%s251 + $0x90] sm:$0xff]
        %v273 = vld [vmem:[%s251 + $0x98] sm:$0xff]
        %v274 = vld [vmem:[%s251 + $0xa0] sm:$0xff]
        %v275 = vld [vmem:[%s251 + $0xa8] sm:$0xff]
        %v276 = vld [vmem:[%s251 + $0xb0] sm:$0xff]
        %v277 = vld [vmem:[%s251 + $0xb8] sm:$0xff]
        %v278 = vld [vmem:[%s251 + $0xc0] sm:$0xff]
        %v279 = vld [vmem:[%s251 + $0xc8] sm:$0xff]
        %v280 = vld [vmem:[%s251 + $0xd0] sm:$0xff]
        %v281 = vld [vmem:[%s251 + $0xd8] sm:$0xff]
        %v282 = vld [vmem:[%s251 + $0xe0] sm:$0xff]
        %v283 = vld [vmem:[%s251 + $0xe8] sm:$0xff]
        %v284 = vld [vmem:[%s251 + $0xf0] sm:$0xff]
        %v285 = vld [vmem:[%s251 + $0xf8] sm:$0xff]
        %v286 = vld [vmem:[%s1] sm:$0xff]
        %v287 = vld [vmem:[%s1 + $0x8] sm:$0xff]
        %v288 = vld [vmem:[%s1 + $0x10] sm:$0xff]
        %v289 = vld [vmem:[%s1 + $0x18] sm:$0xff]
        %vm290 = vcmask 261120
        %v292 = vsel %vm290, %v254, 0
        %v295 = vsel %vm290, %v255, 0
        %v298 = vsel %vm290, %v256, 0
        %v301 = vsel %vm290, %v257, 0
        %v304 = vsel %vm290, %v258, 0
        %v307 = vsel %vm290, %v259, 0
        %v310 = vsel %vm290, %v260, 0
        %v313 = vsel %vm290, %v261, 0
        %v316 = vsel %vm290, %v262, 0
        %v319 = vsel %vm290, %v263, 0
        %v322 = vsel %vm290, %v264, 0
        %v325 = vsel %vm290, %v265, 0
        %v328 = vsel %vm290, %v266, 0
        %v331 = vsel %vm290, %v267, 0
        %v334 = vsel %vm290, %v268, 0
        %v337 = vsel %vm290, %v269, 0
        %v340 = vsel %vm290, %v270, 0
        %v343 = vsel %vm290, %v271, 0
        %v346 = vsel %vm290, %v272, 0
        %v349 = vsel %vm290, %v273, 0
        %v352 = vsel %vm290, %v274, 0
        %v355 = vsel %vm290, %v275, 0
        %v358 = vsel %vm290, %v276, 0
        %v361 = vsel %vm290, %v277, 0
        %v364 = vsel %vm290, %v278, 0
        %v367 = vsel %vm290, %v279, 0
        %v370 = vsel %vm290, %v280, 0
        %v373 = vsel %vm290, %v281, 0
        %v376 = vsel %vm290, %v282, 0
        %v379 = vsel %vm290, %v283, 0
        %v382 = vsel %vm290, %v284, 0
        %v385 = vsel %vm290, %v285, 0
        %387 = vmatpush.msra.mxu0 0.0
        %388 = vmatpush.msra.mxu0 0.0
        %389 = vmatpush.msra.mxu0 0.0
        %390 = vmatpush.msra.mxu0 0.0
        %391 = vmatpush.msra.mxu0 0.0
        %392 = vmatpush.msra.mxu0 0.0
        %393 = vmatpush.msra.mxu0 0.0
        %394 = vmatpush.msra.mxu0 0.0
        %395 = vmatpush.msra.mxu0 0.0
        %396 = vmatpush.msra.mxu0 0.0
        %397 = vmatpush.msra.mxu0 0.0
        %398 = vmatpush.msra.mxu0 0.0
        %399 = vmatpush.msra.mxu0 %v289
        %400 = vmatpush.msra.mxu0 %v288
        %401 = vmatpush.msra.mxu0 %v287
        %402 = vmatpush.msra.mxu0 %v286
        %403 = vmatmul.f32.gmra.mxu0 %v292
        %v404 = vpop.f32.mrf.mxu0
        %v405 = vadd.f32 0.0, %v404
        %406 = vmatmul.f32.gmra.mxu0 %v295
        %v407 = vpop.f32.mrf.mxu0
        %v408 = vadd.f32 0.0, %v407
        %409 = vmatmul.f32.gmra.mxu0 %v298
        %v410 = vpop.f32.mrf.mxu0
        %v411 = vadd.f32 0.0, %v410
        %412 = vmatmul.f32.gmra.mxu0 %v301
        %v413 = vpop.f32.mrf.mxu0
        %v414 = vadd.f32 0.0, %v413
        %415 = vmatmul.f32.gmra.mxu0 %v304
        %v416 = vpop.f32.mrf.mxu0
        %v417 = vadd.f32 0.0, %v416
        %418 = vmatmul.f32.gmra.mxu0 %v307
        %v419 = vpop.f32.mrf.mxu0
        %v420 = vadd.f32 0.0, %v419
        %421 = vmatmul.f32.gmra.mxu0 %v310
        %v422 = vpop.f32.mrf.mxu0
        %v423 = vadd.f32 0.0, %v422
        %424 = vmatmul.f32.gmra.mxu0 %v313
        %v425 = vpop.f32.mrf.mxu0
        %v426 = vadd.f32 0.0, %v425
        %427 = vmatmul.f32.gmra.mxu0 %v316
        %v428 = vpop.f32.mrf.mxu0
        %v429 = vadd.f32 0.0, %v428
        %430 = vmatmul.f32.gmra.mxu0 %v319
        %v431 = vpop.f32.mrf.mxu0
        %v432 = vadd.f32 0.0, %v431
        %433 = vmatmul.f32.gmra.mxu0 %v322
        %v434 = vpop.f32.mrf.mxu0
        %v435 = vadd.f32 0.0, %v434
        %436 = vmatmul.f32.gmra.mxu0 %v325
        %v437 = vpop.f32.mrf.mxu0
        %v438 = vadd.f32 0.0, %v437
        %439 = vmatmul.f32.gmra.mxu0 %v328
        %v440 = vpop.f32.mrf.mxu0
        %v441 = vadd.f32 0.0, %v440
        %442 = vmatmul.f32.gmra.mxu0 %v331
        %v443 = vpop.f32.mrf.mxu0
        %v444 = vadd.f32 0.0, %v443
        %445 = vmatmul.f32.gmra.mxu0 %v334
        %v446 = vpop.f32.mrf.mxu0
        %v447 = vadd.f32 0.0, %v446
        %448 = vmatmul.f32.gmra.mxu0 %v337
        %v449 = vpop.f32.mrf.mxu0
        %v450 = vadd.f32 0.0, %v449
        %451 = vmatmul.f32.gmra.mxu0 %v340
        %v452 = vpop.f32.mrf.mxu0
        %v453 = vadd.f32 0.0, %v452
        %454 = vmatmul.f32.gmra.mxu0 %v343
        %v455 = vpop.f32.mrf.mxu0
        %v456 = vadd.f32 0.0, %v455
        %457 = vmatmul.f32.gmra.mxu0 %v346
        %v458 = vpop.f32.mrf.mxu0
        %v459 = vadd.f32 0.0, %v458
        %460 = vmatmul.f32.gmra.mxu0 %v349
        %v461 = vpop.f32.mrf.mxu0
        %v462 = vadd.f32 0.0, %v461
        %463 = vmatmul.f32.gmra.mxu0 %v352
        %v464 = vpop.f32.mrf.mxu0
        %v465 = vadd.f32 0.0, %v464
        %466 = vmatmul.f32.gmra.mxu0 %v355
        %v467 = vpop.f32.mrf.mxu0
        %v468 = vadd.f32 0.0, %v467
        %469 = vmatmul.f32.gmra.mxu0 %v358
        %v470 = vpop.f32.mrf.mxu0
        %v471 = vadd.f32 0.0, %v470
        %472 = vmatmul.f32.gmra.mxu0 %v361
        %v473 = vpop.f32.mrf.mxu0
        %v474 = vadd.f32 0.0, %v473
        %475 = vmatmul.f32.gmra.mxu0 %v364
        %v476 = vpop.f32.mrf.mxu0
        %v477 = vadd.f32 0.0, %v476
        %478 = vmatmul.f32.gmra.mxu0 %v367
        %v479 = vpop.f32.mrf.mxu0
        %v480 = vadd.f32 0.0, %v479
        %481 = vmatmul.f32.gmra.mxu0 %v370
        %v482 = vpop.f32.mrf.mxu0
        %v483 = vadd.f32 0.0, %v482
        %484 = vmatmul.f32.gmra.mxu0 %v373
        %v485 = vpop.f32.mrf.mxu0
        %v486 = vadd.f32 0.0, %v485
        %487 = vmatmul.f32.gmra.mxu0 %v376
        %v488 = vpop.f32.mrf.mxu0
        %v489 = vadd.f32 0.0, %v488
        %490 = vmatmul.f32.gmra.mxu0 %v379
        %v491 = vpop.f32.mrf.mxu0
        %v492 = vadd.f32 0.0, %v491
        %493 = vmatmul.f32.gmra.mxu0 %v382
        %v494 = vpop.f32.mrf.mxu0
        %v495 = vadd.f32 0.0, %v494
        %496 = vmatmul.f32.gmra.mxu0 %v385
        %v497 = vpop.f32.mrf.mxu0
        %v498 = vadd.f32 0.0, %v497
        %499 = vdwg.mxu0
        %500 = vxpose.xlu0.b32.start [1/16] %v405, 128
        %501 = vxpose.xlu0.b32.cont [2/16] %v408, 128
        %502 = vxpose.xlu0.b32.cont [3/16] %v411, 128
        %503 = vxpose.xlu0.b32.cont [4/16] %v414, 128
        %504 = vxpose.xlu0.b32.cont [5/16] %v417, 128
        %505 = vxpose.xlu0.b32.cont [6/16] %v420, 128
        %506 = vxpose.xlu0.b32.cont [7/16] %v423, 128
        %507 = vxpose.xlu0.b32.cont [8/16] %v426, 128
        %508 = vxpose.xlu0.b32.cont [9/16] %v429, 128
        %509 = vxpose.xlu0.b32.cont [10/16] %v432, 128
        %510 = vxpose.xlu0.b32.cont [11/16] %v435, 128
        %511 = vxpose.xlu0.b32.cont [12/16] %v438, 128
        %512 = vxpose.xlu0.b32.cont [13/16] %v441, 128
        %513 = vxpose.xlu0.b32.cont [14/16] %v444, 128
        %514 = vxpose.xlu0.b32.cont [15/16] %v447, 128
        %515 = vxpose.xlu0.b32.end [16/16] %v450, 128
        %v516 = vpop.trf.xlu0
        %v517 = vpop.trf.xlu0
        %v518 = vpop.trf.xlu0
        %v519 = vpop.trf.xlu0
        %v520 = vpop.trf.xlu0
        %v521 = vpop.trf.xlu0
        %v522 = vpop.trf.xlu0
        %v523 = vpop.trf.xlu0
        %v524 = vpop.trf.xlu0
        %v525 = vpop.trf.xlu0
        %v526 = vpop.trf.xlu0
        %v527 = vpop.trf.xlu0
        %v528 = vpop.trf.xlu0
        %v529 = vpop.trf.xlu0
        %v530 = vpop.trf.xlu0
        %v531 = vpop.trf.xlu0
        %532 = vxpose.xlu0.b32.start [1/16] %v453, 128
        %533 = vxpose.xlu0.b32.cont [2/16] %v456, 128
        %534 = vxpose.xlu0.b32.cont [3/16] %v459, 128
        %535 = vxpose.xlu0.b32.cont [4/16] %v462, 128
        %536 = vxpose.xlu0.b32.cont [5/16] %v465, 128
        %537 = vxpose.xlu0.b32.cont [6/16] %v468, 128
        %538 = vxpose.xlu0.b32.cont [7/16] %v471, 128
        %539 = vxpose.xlu0.b32.cont [8/16] %v474, 128
        %540 = vxpose.xlu0.b32.cont [9/16] %v477, 128
        %541 = vxpose.xlu0.b32.cont [10/16] %v480, 128
        %542 = vxpose.xlu0.b32.cont [11/16] %v483, 128
        %543 = vxpose.xlu0.b32.cont [12/16] %v486, 128
        %544 = vxpose.xlu0.b32.cont [13/16] %v489, 128
        %545 = vxpose.xlu0.b32.cont [14/16] %v492, 128
        %546 = vxpose.xlu0.b32.cont [15/16] %v495, 128
        %547 = vxpose.xlu0.b32.end [16/16] %v498, 128
        %v548 = vpop.trf.xlu0
        %v549 = vpop.trf.xlu0
        %v550 = vpop.trf.xlu0
        %v551 = vpop.trf.xlu0
        %v552 = vpop.trf.xlu0
        %v553 = vpop.trf.xlu0
        %v554 = vpop.trf.xlu0
        %v555 = vpop.trf.xlu0
        %v556 = vpop.trf.xlu0
        %v557 = vpop.trf.xlu0
        %v558 = vpop.trf.xlu0
        %v559 = vpop.trf.xlu0
        %v560 = vpop.trf.xlu0
        %v561 = vpop.trf.xlu0
        %v562 = vpop.trf.xlu0
        %v563 = vpop.trf.xlu0
        %v564 = vld [vmem:[%s2] sm:$0xff]
        %566 = vset.pattern.permute.xlu0 0
        %567 = vperm.xlu0 %566, %v564
        %v568 = vpop.permute.xlu0 %567
        %v570 = vadd.f32 %v516, %v568
        %v571 = vadd.f32 %v548, %v568
        %v572 = vrot.slane %v570, 4
        %v573 = vadd.f32 %v570, %v572
        %v574 = vrot.slane %v573, 2
        %v575 = vadd.f32 %v573, %v574
        %v576 = vrot.slane %v575, 1
        %v577 = vadd.f32 %v575, %v576
        %v578 = vrot.slane %v571, 4
        %v579 = vadd.f32 %v571, %v578
        %v580 = vrot.slane %v579, 2
        %v581 = vadd.f32 %v579, %v580
        %v582 = vrot.slane %v581, 1
        %v583 = vadd.f32 %v581, %v582
        %v584 = vmul.f32 %v577, 0.125
        %v585 = vmul.f32 %v583, 0.125
        %v586 = vsub.f32 %v570, %v584
        %v587 = vsub.f32 %v571, %v585
        %v588 = vmul.f32 %v586, %v586
        %v589 = vmul.f32 %v587, %v587
        %v590 = vrot.slane %v588, 4
        %v591 = vadd.f32 %v588, %v590
        %v592 = vrot.slane %v591, 2
        %v593 = vadd.f32 %v591, %v592
        %v594 = vrot.slane %v593, 1
        %v595 = vadd.f32 %v593, %v594
        %v596 = vrot.slane %v589, 4
        %v597 = vadd.f32 %v589, %v596
        %v598 = vrot.slane %v597, 2
        %v599 = vadd.f32 %v597, %v598
        %v600 = vrot.slane %v599, 1
        %v601 = vadd.f32 %v599, %v600
        %v602 = vmul.f32 %v595, 0.125
        %v603 = vmul.f32 %v601, 0.125
        %v604 = vadd.f32 %v602, 1e-05
        %v605 = vadd.f32 %v603, 1e-05
        %v606 = vrsqrt.pop %v604
        %v607 = vmul.f32 %v606, %v604
        %v608 = vmul.f32 %v607, %v606
        %v609 = vmul.f32 0.5, %v608
        %v610 = vsub.f32 1.5, %v609
        %v611 = vmul.f32 %v606, %v610
        %vm612 = vweird.f32 %v604
        %vm613 = vweird.f32 %v606
        %vm614 = vmor %vm612, %vm613
        %v615 = vsel %vm614, %v606, %v611
        %v616 = vrsqrt.pop %v605
        %v617 = vmul.f32 %v616, %v605
        %v618 = vmul.f32 %v617, %v616
        %v619 = vmul.f32 0.5, %v618
        %v620 = vsub.f32 1.5, %v619
        %v621 = vmul.f32 %v616, %v620
        %vm622 = vweird.f32 %v605
        %vm623 = vweird.f32 %v616
        %vm624 = vmor %vm622, %vm623
        %v625 = vsel %vm624, %v616, %v621
        %v626 = vmul.f32 %v586, %v615
        %v627 = vmul.f32 %v587, %v625
        %v628 = vld [vmem:[%s3] sm:$0xff]
        %v629 = vld [vmem:[%s4] sm:$0xff]
        %631 = vset.pattern.permute.xlu0 0
        %632 = vperm.xlu0 %631, %v629
        %v633 = vpop.permute.xlu0 %632
        %vm635 = vcmask 64512
        %v637 = vsel %vm635, %v628, 0
        %639 = vmatpush.msra.mxu0 0.0
        %640 = vmatpush.msra.mxu0 0.0
        %641 = vmatpush.msra.mxu0 0.0
        %642 = vmatpush.msra.mxu0 0.0
        %643 = vmatpush.msra.mxu0 0.0
        %644 = vmatpush.msra.mxu0 0.0
        %645 = vmatpush.msra.mxu0 0.0
        %646 = vmatpush.msra.mxu0 0.0
        %647 = vmatpush.msra.mxu0 0.0
        %648 = vmatpush.msra.mxu0 0.0
        %649 = vmatpush.msra.mxu0 0.0
        %650 = vmatpush.msra.mxu0 0.0
        %651 = vmatpush.msra.mxu0 0.0
        %652 = vmatpush.msra.mxu0 0.0
        %653 = vmatpush.msra.mxu0 0.0
        %654 = vmatpush.msra.mxu0 %v626
        %655 = vmatmul.f32.gmra.mxu0 %v637
        %v656 = vpop.f32.mrf.mxu0
        %v657 = vadd.f32 %v633, %v656
        %658 = vdwg.mxu0
        %659 = vmatpush.msra.mxu0 0.0
        %660 = vmatpush.msra.mxu0 0.0
        %661 = vmatpush.msra.mxu0 0.0
        %662 = vmatpush.msra.mxu0 0.0
        %663 = vmatpush.msra.mxu0 0.0
        %664 = vmatpush.msra.mxu0 0.0
        %665 = vmatpush.msra.mxu0 0.0
        %666 = vmatpush.msra.mxu0 0.0
        %667 = vmatpush.msra.mxu0 0.0
        %668 = vmatpush.msra.mxu0 0.0
        %669 = vmatpush.msra.mxu0 0.0
        %670 = vmatpush.msra.mxu0 0.0
        %671 = vmatpush.msra.mxu0 0.0
        %672 = vmatpush.msra.mxu0 0.0
        %673 = vmatpush.msra.mxu0 0.0
        %674 = vmatpush.msra.mxu0 %v627
        %675 = vmatmul.f32.gmra.mxu0 %v637
        %v676 = vpop.f32.mrf.mxu0
        %v677 = vadd.f32 %v633, %v676
        %678 = vdwg.mxu0
        %679 = vst [vmem:[%s242] sm:$0xff] %v657
        %680 = vst [vmem:[%s242 + $0x8] sm:$0xff] %v677
        %s681 = sand.u32 %s153, 1
        %s682 = scalar_lea.sflag [#allocation3], %s681
        %s683 = sand.u32 %s153, 1
        %s684 = smul.addr %s683, 16
        %s685 = scalar_lea.vmem [#allocation2], %s684
        // Predicated region
        $region41: #{tpu_custom_call.1} parent=39 // pred_check
          %p686 = pneg %p163
        $region42: #{tpu_custom_call.1} parent=39 // pred_check_branch
          %688 = sbr.rel (%p686) target = $region44
        $region43: #{tpu_custom_call.1} parent=39 // pred_region
          %s689 = smul.u32 2, %s24
          %691 = vsyncadd %s682, 0
          %s692 = smul.addr %s23, 2
          %s693 = sadd.s32 %s689, %s692
          %s694 = smul.addr %s693, 8
          %s695 = scalar_lea.hbm %s5, %s694
          %s697 = sshll.u32 %s685, 4
          %s698 = int_to_ptr.vmem [resolvable:$true] %s697
          %s699 = sshll.u32 %s695, 4
          %s700 = int_to_ptr.hbm [resolvable:$true] %s699
          %702 = dma.vmem_to_hbm [thread:$0]  %s698, 256, %s700, %s682
        $region44: #{tpu_custom_call.1} parent=39 // pred_fallthru
          _
      $region40: #{tpu_custom_call.1} parent=5 // pred_fallthru
        _
      %p703 = scmp.le.s32.totalorder 2, %s14
      // Predicated region
      $region45: #{tpu_custom_call.1} parent=5 // pred_check
        %p704 = pneg %p703
      $region46: #{tpu_custom_call.1} parent=5 // pred_check_branch
        %706 = sbr.rel (%p704) target = $region48
      $region47: #{tpu_custom_call.1} parent=5 // pred_region
        %s707 = ssub.s32 %s14, 2
        // Predicated region
        $region49: #{tpu_custom_call.1} parent=47 // pred_check
          %p708 = pneg %p169
        $region50: #{tpu_custom_call.1} parent=47 // pred_check_branch
          %710 = sbr.rel (%p708) target = $region52
        $region51: #{tpu_custom_call.1} parent=47 // pred_region
          %s711 = sand.u32 %s154, 1
          %s712 = scalar_lea.sflag [#allocation3], %s711
          %s713 = sand.u32 %s154, 1
          %s714 = smul.addr %s713, 16
          %s715 = scalar_lea.vmem [#allocation2], %s714
          %717 = dma.done %s712, 256
        $region52: #{tpu_custom_call.1} parent=47 // pred_fallthru
          _
      $region48: #{tpu_custom_call.1} parent=5 // pred_fallthru
        _
    $region6: #{tpu_custom_call.1} parent=1 // loop_footer
      %s18 = sadd.s32 1, %s14
    $region7: #{tpu_custom_call.1} parent=1 // loop_footer_branch
      %13 = sbr.rel target = $region3
    $region8: #{tpu_custom_call.1} parent=1 // loop_exit
      _
    %718 = vsyncpa [#allocation3], 1
    %s719 = scalar_lea.sflag [#allocation3], 1
    %720 = vsyncpa %s719, 1

// kernel: tpu_custom_call.1
$region0: #{tpu_custom_call.1}
  #allocation0 [shape = 'u32[]', space=smem, size = 0x4, offset = 0x4, fixed_abs, tag = 'smem constant byte address 0x4 - core index']
  #allocation1 [shape = 'u32[72,128]{1,0:T(1,128)}', space=vmem, size = 0x9000, scoped, tag = 'internal scratch']
  %s0 = inlined_call_operand.vmem [shape: f32[2,256,32], index: 0, kind: input, shape index: {}]
  %s1 = inlined_call_operand.vmem [shape: f32[32,8], index: 1, kind: input, shape index: {}]
  %s2 = inlined_call_operand.vmem [shape: f32[8,1], index: 2, kind: input, shape index: {}]
  %s3 = inlined_call_operand.vmem [shape: f32[8,8], index: 3, kind: input, shape index: {}]
  %s4 = inlined_call_operand.vmem [shape: f32[8,1], index: 4, kind: input, shape index: {}]
  %s5 = inlined_call_operand.hbm [shape: f32[2,8,256], index: 5, kind: output, shape index: {}]
  %s6 = sld [smem:[#allocation0]]
  $region53: #{tpu_custom_call.1} parent=0
    _
  %s8 = ssub.s32 1, %s6
  %s9 = scalar_select 0, %s8, %s6
  $region1: #{tpu_custom_call.1} parent=0
    #allocation2 [shape = 'u8[16384]{0}', space=vmem, size = 0x4000, scoped, tag = 'output window, operand 0']
    #allocation3 [shape = 's32[2]{0}', space=sflag, size = 0x8, scoped, tag = 'scoped memory for tpu_custom_call.1']
    %10 = vsyncpa [#allocation3], 0
    %s11 = scalar_lea.sflag [#allocation3], 1
    %12 = vsyncpa %s11, 0
    loop: start=0, step=1, limit=4
    $region2: #{tpu_custom_call.1} parent=1 // loop_pre_header
      _
    $region3: #{tpu_custom_call.1} parent=1 // loop_header
      %s14 = sphi 0, %s18
      %p15 = scmp.ge.s32.totalorder %s14, 4
      %s21 = sphi 0, %s33
      %s22 = sphi 0, %s29
      %s23 = sphi 0, %s21
      %s24 = sphi 0, %s22
      %s25 = sphi 0, %s23
      %s26 = sphi 0, %s24
      %s38 = sphi 0, %s40
      %s41 = sphi 0, %s38
      %s42 = sphi 0, %s41
      %s58 = sphi 0, %s42
      %s62 = sphi 0, %s62
      %s64 = sphi 0, %s62
      %s65 = sphi 0, %s64
      %s79 = sphi 0, %s65
      %s83 = sphi 0, %s83
      %s85 = sphi 0, %s83
      %s86 = sphi 0, %s85
      %s100 = sphi 0, %s86
      %s104 = sphi 0, %s104
      %s106 = sphi 0, %s104
      %s107 = sphi 0, %s106
      %s121 = sphi 0, %s107
      %s125 = sphi 0, %s125
      %s127 = sphi 0, %s125
      %s128 = sphi 0, %s127
      %s142 = sphi 0, %s128
      %s150 = sphi 0, %s152
      %s153 = sphi 0, %s150
      %s154 = sphi 0, %s153
      %s170 = sphi 0, %s154
    $region4: #{tpu_custom_call.1} parent=1 // loop_header_branch
      %17 = sbr.rel (%p15) target = $region8
    $region5: #{tpu_custom_call.1} parent=1 // loop_body
      %s19 = ssub.s32 %s14, 1
      %s20 = ssub.s32 %s14, 2
      %s27 = sadd.s32 1, %s22
      %p28 = scmp.ge.s32.totalorder %s27, 1
      %s29 = scalar_select %p28, 0, %s27
      %s30 = sadd.s32 1, %s21
      %s31 = scalar_select %p28, %s30, %s21
      %p32 = scmp.ge.s32.totalorder %s31, 2
      %s33 = scalar_select %p32, 0, %s31
      %s34 = ssub.s32 %s21, %s33
      %s35 = ssub.s32 %s22, %s29
      %s36 = sor.u32 %s34, %s35
      %p37 = scmp.eq.s32.totalorder %s36, 0
      %s39 = sadd.s32 %s38, 1
      %s40 = scalar_select %p37, %s38, %s39
      %p43 = pneg %p37
      %p44 = scmp.eq.s32.totalorder %s14, 1
      %p45 = por %p43, %p44
      %p46 = scmp.ne.s32.totalorder %s38, %s41
      %p47 = scmp.eq.s32.totalorder %s14, 0
      %p48 = por %p46, %p47
      %p49 = scmp.ne.s32.totalorder %s38, %s41
      %p50 = scmp.eq.s32.totalorder %s19, 1
      %p51 = por %p49, %p50
      %p52 = scmp.ne.s32.totalorder %s41, %s42
      %p53 = scmp.eq.s32.totalorder %s19, 0
      %p54 = por %p52, %p53
      %p55 = scmp.ne.s32.totalorder %s41, %s42
      %p56 = scmp.eq.s32.totalorder %s20, 1
      %p57 = por %p55, %p56
      %p59 = scmp.ne.s32.totalorder %s42, %s58
      %p60 = scmp.eq.s32.totalorder %s20, 0
      %p61 = por %p59, %p60
      %s63 = sadd.s32 %s62, 1
      %p66 = scmp.eq.s32.totalorder %s14, 1
      %p67 = scmp.ne.s32.totalorder %s62, %s64
      %p68 = scmp.eq.s32.totalorder %s14, 0
      %p69 = por %p67, %p68
      %p70 = scmp.ne.s32.totalorder %s62, %s64
      %p71 = scmp.eq.s32.totalorder %s19, 1
      %p72 = por %p70, %p71
      %p73 = scmp.ne.s32.totalorder %s64, %s65
      %p74 = scmp.eq.s32.totalorder %s19, 0
      %p75 = por %p73, %p74
      %p76 = scmp.ne.s32.totalorder %s64, %s65
      %p77 = scmp.eq.s32.totalorder %s20, 1
      %p78 = por %p76, %p77
      %p80 = scmp.ne.s32.totalorder %s65, %s79
      %p81 = scmp.eq.s32.totalorder %s20, 0
      %p82 = por %p80, %p81
      %s84 = sadd.s32 %s83, 1
      %p87 = scmp.eq.s32.totalorder %s14, 1
      %p88 = scmp.ne.s32.totalorder %s83, %s85
      %p89 = scmp.eq.s32.totalorder %s14, 0
      %p90 = por %p88, %p89
      %p91 = scmp.ne.s32.totalorder %s83, %s85
      %p92 = scmp.eq.s32.totalorder %s19, 1
      %p93 = por %p91, %p92
      %p94 = scmp.ne.s32.totalorder %s85, %s86
      %p95 = scmp.eq.s32.totalorder %s19, 0
      %p96 = por %p94, %p95
      %p97 = scmp.ne.s32.totalorder %s85, %s86
      %p98 = scmp.eq.s32.totalorder %s20, 1
      %p99 = por %p97, %p98
      %p101 = scmp.ne.s32.totalorder %s86, %s100
      %p102 = scmp.eq.s32.totalorder %s20, 0
      %p103 = por %p101, %p102
      %s105 = sadd.s32 %s104, 1
      %p108 = scmp.eq.s32.totalorder %s14, 1
      %p109 = scmp.ne.s32.totalorder %s104, %s106
      %p110 = scmp.eq.s32.totalorder %s14, 0
      %p111 = por %p109, %p110
      %p112 = scmp.ne.s32.totalorder %s104, %s106
      %p113 = scmp.eq.s32.totalorder %s19, 1
      %p114 = por %p112, %p113
      %p115 = scmp.ne.s32.totalorder %s106, %s107
      %p116 = scmp.eq.s32.totalorder %s19, 0
      %p117 = por %p115, %p116
      %p118 = scmp.ne.s32.totalorder %s106, %s107
      %p119 = scmp.eq.s32.totalorder %s20, 1
      %p120 = por %p118, %p119
      %p122 = scmp.ne.s32.totalorder %s107, %s121
      %p123 = scmp.eq.s32.totalorder %s20, 0
      %p124 = por %p122, %p123
      %s126 = sadd.s32 %s125, 1
      %p129 = scmp.eq.s32.totalorder %s14, 1
      %p130 = scmp.ne.s32.totalorder %s125, %s127
      %p131 = scmp.eq.s32.totalorder %s14, 0
      %p132 = por %p130, %p131
      %p133 = scmp.ne.s32.totalorder %s125, %s127
      %p134 = scmp.eq.s32.totalorder %s19, 1
      %p135 = por %p133, %p134
      %p136 = scmp.ne.s32.totalorder %s127, %s128
      %p137 = scmp.eq.s32.totalorder %s19, 0
      %p138 = por %p136, %p137
      %p139 = scmp.ne.s32.totalorder %s127, %s128
      %p140 = scmp.eq.s32.totalorder %s20, 1
      %p141 = por %p139, %p140
      %p143 = scmp.ne.s32.totalorder %s128, %s142
      %p144 = scmp.eq.s32.totalorder %s20, 0
      %p145 = por %p143, %p144
      %s146 = ssub.s32 %s21, %s33
      %s147 = ssub.s32 %s22, %s29
      %s148 = sor.u32 %s146, %s147
      %p149 = scmp.eq.s32.totalorder %s148, 0
      %s151 = sadd.s32 %s150, 1
      %s152 = scalar_select %p149, %s150, %s151
      %p155 = pneg %p149
      %p156 = scmp.eq.s32.totalorder %s14, 1
      %p157 = por %p155, %p156
      %p158 = scmp.ne.s32.totalorder %s150, %s153
      %p159 = scmp.eq.s32.totalorder %s14, 0
      %p160 = por %p158, %p159
      %p161 = scmp.ne.s32.totalorder %s150, %s153
      %p162 = scmp.eq.s32.totalorder %s19, 1
      %p163 = por %p161, %p162
      %p164 = scmp.ne.s32.totalorder %s153, %s154
      %p165 = scmp.eq.s32.totalorder %s19, 0
      %p166 = por %p164, %p165
      %p167 = scmp.ne.s32.totalorder %s153, %s154
      %p168 = scmp.eq.s32.totalorder %s20, 1
      %p169 = por %p167, %p168
      %p171 = scmp.ne.s32.totalorder %s154, %s170
      %p172 = scmp.eq.s32.totalorder %s20, 0
      %p173 = por %p171, %p172
      %p174 = scmp.le.s32.totalorder 1, %s14
      %p175 = scmp.lt.s32.totalorder %s14, 3
      %p176 = pnand %p174, %p175
      %p177 = pneg %p176
      // Predicated region
      $region9: #{tpu_custom_call.1} parent=5 // pred_check
        _
      $region10: #{tpu_custom_call.1} parent=5 // pred_check_branch
        %179 = sbr.rel (%p176) target = $region12
      $region11: #{tpu_custom_call.1} parent=5 // pred_region
        %s180 = ssub.s32 %s14, 1
        // Predicated region
        $region13: #{tpu_custom_call.1} parent=11 // pred_check
          %p181 = pneg %p75
        $region14: #{tpu_custom_call.1} parent=11 // pred_check_branch
          %183 = sbr.rel (%p181) target = $region16
        $region15: #{tpu_custom_call.1} parent=11 // pred_region
          _
        $region16: #{tpu_custom_call.1} parent=11 // pred_fallthru
          _
        // Predicated region
        $region17: #{tpu_custom_call.1} parent=11 // pred_check
          %p184 = pneg %p96
        $region18: #{tpu_custom_call.1} parent=11 // pred_check_branch
          %186 = sbr.rel (%p184) target = $region20
        $region19: #{tpu_custom_call.1} parent=11 // pred_region
          _
        $region20: #{tpu_custom_call.1} parent=11 // pred_fallthru
          _
        // Predicated region
        $region21: #{tpu_custom_call.1} parent=11 // pred_check
          %p187 = pneg %p117
        $region22: #{tpu_custom_call.1} parent=11 // pred_check_branch
          %189 = sbr.rel (%p187) target = $region24
        $region23: #{tpu_custom_call.1} parent=11 // pred_region
          _
        $region24: #{tpu_custom_call.1} parent=11 // pred_fallthru
          _
        // Predicated region
        $region25: #{tpu_custom_call.1} parent=11 // pred_check
          %p190 = pneg %p138
        $region26: #{tpu_custom_call.1} parent=11 // pred_check_branch
          %192 = sbr.rel (%p190) target = $region28
        $region27: #{tpu_custom_call.1} parent=11 // pred_region
          _
        $region28: #{tpu_custom_call.1} parent=11 // pred_fallthru
          _
      $region12: #{tpu_custom_call.1} parent=5 // pred_fallthru
        _
      %p193 = scmp.lt.s32.totalorder %s14, 2
      // Predicated region
      $region29: #{tpu_custom_call.1} parent=5 // pred_check
        %p194 = pneg %p193
      $region30: #{tpu_custom_call.1} parent=5 // pred_check_branch
        %196 = sbr.rel (%p194) target = $region32
      $region31: #{tpu_custom_call.1} parent=5 // pred_region
        // Predicated region
        $region33: #{tpu_custom_call.1} parent=31 // pred_check
          %p197 = pneg %p48
        $region34: #{tpu_custom_call.1} parent=31 // pred_check_branch
          %199 = sbr.rel (%p197) target = $region36
        $region35: #{tpu_custom_call.1} parent=31 // pred_region
          %s200 = smul.u32 32, %s22
          %p201 = scmp.lt.s32.totalorder %s21, 1
          %s202 = scalar_select %p201, %s21, 1
          %p203 = scmp.lt.s32.totalorder %s200, 31
          %s204 = scalar_select %p203, %s200, 31
          %s205 = smul.addr %s202, 32
          %s206 = sadd.s32 %s204, %s205
          %s207 = smul.addr %s206, 8
          %s208 = scalar_lea.vmem %s0, %s207
          %s209 = smul.u32 32, %s22
        $region36: #{tpu_custom_call.1} parent=31 // pred_fallthru
          _
      $region32: #{tpu_custom_call.1} parent=5 // pred_fallthru
        _
      %p210 = scmp.le.s32.totalorder 1, %s14
      %p211 = scmp.lt.s32.totalorder %s14, 3
      %p212 = pnand %p210, %p211
      %p213 = pneg %p212
      // Predicated region
      $region37: #{tpu_custom_call.1} parent=5 // pred_check
        _
      $region38: #{tpu_custom_call.1} parent=5 // pred_check_branch
        %215 = sbr.rel (%p212) target = $region40
      $region39: #{tpu_custom_call.1} parent=5 // pred_region
        %s216 = ssub.s32 %s14, 1
        %s217 = smul.u32 32, %s24
        %p218 = scmp.lt.s32.totalorder %s23, 1
        %s219 = scalar_select %p218, %s23, 1
        %p220 = scmp.lt.s32.totalorder %s217, 31
        %s221 = scalar_select %p220, %s217, 31
        %s222 = smul.addr %s219, 32
        %s223 = sadd.s32 %s221, %s222
        %s224 = smul.addr %s223, 8
        %s225 = scalar_lea.vmem %s0, %s224
        %p226 = pneg %p54
        %p227 = pneg %p51
        %p228 = pneg %p75
        %p229 = pneg %p72
        %p230 = pneg %p96
        %p231 = pneg %p93
        %p232 = pneg %p117
        %p233 = pneg %p114
        %p234 = pneg %p138
        %p235 = pneg %p135
        %p236 = pneg %p166
        %p237 = pneg %p163
        %s238 = sand.u32 %s153, 1
        %s239 = scalar_lea.sflag [#allocation3], %s238
        %s240 = sand.u32 %s153, 1
        %s241 = smul.addr %s240, 16
        %s242 = scalar_lea.vmem [#allocation2], %s241
        %s243 = smul.u32 32, %s24
        %p244 = scmp.lt.s32.totalorder %s23, 1
        %s245 = scalar_select %p244, %s23, 1
        %p246 = scmp.lt.s32.totalorder %s243, 31
        %s247 = scalar_select %p246, %s243, 31
        %s248 = smul.addr %s245, 32
        %s249 = sadd.s32 %s247, %s248
        %s250 = smul.addr %s249, 8
        %s251 = scalar_lea.vmem %s0, %s250
        %s252 = smul.u32 32, %s24
        %s253 = smul.u32 2, %s24
        %v254 = vld [vmem:[%s251] sm:$0xff]
        %v255 = vld [vmem:[%s251 + $0x8] sm:$0xff]
        %v256 = vld [vmem:[%s251 + $0x10] sm:$0xff]
        %v257 = vld [vmem:[%s251 + $0x18] sm:$0xff]
        %v258 = vld [vmem:[%s251 + $0x20] sm:$0xff]
        %v259 = vld [vmem:[%s251 + $0x28] sm:$0xff]
        %v260 = vld [vmem:[%s251 + $0x30] sm:$0xff]
        %v261 = vld [vmem:[%s251 + $0x38] sm:$0xff]
        %v262 = vld [vmem:[%s251 + $0x40] sm:$0xff]
        %v263 = vld [vmem:[%s251 + $0x48] sm:$0xff]
        %v264 = vld [vmem:[%s251 + $0x50] sm:$0xff]
        %v265 = vld [vmem:[%s251 + $0x58] sm:$0xff]
        %v266 = vld [vmem:[%s251 + $0x60] sm:$0xff]
        %v267 = vld [vmem:[%s251 + $0x68] sm:$0xff]
        %v268 = vld [vmem:[%s251 + $0x70] sm:$0xff]
        %v269 = vld [vmem:[%s251 + $0x78] sm:$0xff]
        %v270 = vld [vmem:[%s251 + $0x80] sm:$0xff]
        %v271 = vld [vmem:[%s251 + $0x88] sm:$0xff]
        %v272 = vld [vmem:[%s251 + $0x90] sm:$0xff]
        %v273 = vld [vmem:[%s251 + $0x98] sm:$0xff]
        %v274 = vld [vmem:[%s251 + $0xa0] sm:$0xff]
        %v275 = vld [vmem:[%s251 + $0xa8] sm:$0xff]
        %v276 = vld [vmem:[%s251 + $0xb0] sm:$0xff]
        %v277 = vld [vmem:[%s251 + $0xb8] sm:$0xff]
        %v278 = vld [vmem:[%s251 + $0xc0] sm:$0xff]
        %v279 = vld [vmem:[%s251 + $0xc8] sm:$0xff]
        %v280 = vld [vmem:[%s251 + $0xd0] sm:$0xff]
        %v281 = vld [vmem:[%s251 + $0xd8] sm:$0xff]
        %v282 = vld [vmem:[%s251 + $0xe0] sm:$0xff]
        %v283 = vld [vmem:[%s251 + $0xe8] sm:$0xff]
        %v284 = vld [vmem:[%s251 + $0xf0] sm:$0xff]
        %v285 = vld [vmem:[%s251 + $0xf8] sm:$0xff]
        %v286 = vld [vmem:[%s1] sm:$0xff]
        %v287 = vld [vmem:[%s1 + $0x8] sm:$0xff]
        %v288 = vld [vmem:[%s1 + $0x10] sm:$0xff]
        %v289 = vld [vmem:[%s1 + $0x18] sm:$0xff]
        %vm290 = vcmask 261120
        %v292 = vsel %vm290, %v254, 0
        %v295 = vsel %vm290, %v255, 0
        %v298 = vsel %vm290, %v256, 0
        %v301 = vsel %vm290, %v257, 0
        %v304 = vsel %vm290, %v258, 0
        %v307 = vsel %vm290, %v259, 0
        %v310 = vsel %vm290, %v260, 0
        %v313 = vsel %vm290, %v261, 0
        %v316 = vsel %vm290, %v262, 0
        %v319 = vsel %vm290, %v263, 0
        %v322 = vsel %vm290, %v264, 0
        %v325 = vsel %vm290, %v265, 0
        %v328 = vsel %vm290, %v266, 0
        %v331 = vsel %vm290, %v267, 0
        %v334 = vsel %vm290, %v268, 0
        %v337 = vsel %vm290, %v269, 0
        %v340 = vsel %vm290, %v270, 0
        %v343 = vsel %vm290, %v271, 0
        %v346 = vsel %vm290, %v272, 0
        %v349 = vsel %vm290, %v273, 0
        %v352 = vsel %vm290, %v274, 0
        %v355 = vsel %vm290, %v275, 0
        %v358 = vsel %vm290, %v276, 0
        %v361 = vsel %vm290, %v277, 0
        %v364 = vsel %vm290, %v278, 0
        %v367 = vsel %vm290, %v279, 0
        %v370 = vsel %vm290, %v280, 0
        %v373 = vsel %vm290, %v281, 0
        %v376 = vsel %vm290, %v282, 0
        %v379 = vsel %vm290, %v283, 0
        %v382 = vsel %vm290, %v284, 0
        %v385 = vsel %vm290, %v285, 0
        %387 = vmatpush.msra.mxu0 0.0
        %388 = vmatpush.msra.mxu0 0.0
        %389 = vmatpush.msra.mxu0 0.0
        %390 = vmatpush.msra.mxu0 0.0
        %391 = vmatpush.msra.mxu0 0.0
        %392 = vmatpush.msra.mxu0 0.0
        %393 = vmatpush.msra.mxu0 0.0
        %394 = vmatpush.msra.mxu0 0.0
        %395 = vmatpush.msra.mxu0 0.0
        %396 = vmatpush.msra.mxu0 0.0
        %397 = vmatpush.msra.mxu0 0.0
        %398 = vmatpush.msra.mxu0 0.0
        %399 = vmatpush.msra.mxu0 %v289
        %400 = vmatpush.msra.mxu0 %v288
        %401 = vmatpush.msra.mxu0 %v287
        %402 = vmatpush.msra.mxu0 %v286
        %403 = vmatmul.f32.gmra.mxu0 %v292
        %v404 = vpop.f32.mrf.mxu0
        %v405 = vadd.f32 0.0, %v404
        %406 = vmatmul.f32.gmra.mxu0 %v295
        %v407 = vpop.f32.mrf.mxu0
        %v408 = vadd.f32 0.0, %v407
        %409 = vmatmul.f32.gmra.mxu0 %v298
        %v410 = vpop.f32.mrf.mxu0
        %v411 = vadd.f32 0.0, %v410
        %412 = vmatmul.f32.gmra.mxu0 %v301
        %v413 = vpop.f32.mrf.mxu0
        %v414 = vadd.f32 0.0, %v413
        %415 = vmatmul.f32.gmra.mxu0 %v304
        %v416 = vpop.f32.mrf.mxu0
        %v417 = vadd.f32 0.0, %v416
        %418 = vmatmul.f32.gmra.mxu0 %v307
        %v419 = vpop.f32.mrf.mxu0
        %v420 = vadd.f32 0.0, %v419
        %421 = vmatmul.f32.gmra.mxu0 %v310
        %v422 = vpop.f32.mrf.mxu0
        %v423 = vadd.f32 0.0, %v422
        %424 = vmatmul.f32.gmra.mxu0 %v313
        %v425 = vpop.f32.mrf.mxu0
        %v426 = vadd.f32 0.0, %v425
        %427 = vmatmul.f32.gmra.mxu0 %v316
        %v428 = vpop.f32.mrf.mxu0
        %v429 = vadd.f32 0.0, %v428
        %430 = vmatmul.f32.gmra.mxu0 %v319
        %v431 = vpop.f32.mrf.mxu0
        %v432 = vadd.f32 0.0, %v431
        %433 = vmatmul.f32.gmra.mxu0 %v322
        %v434 = vpop.f32.mrf.mxu0
        %v435 = vadd.f32 0.0, %v434
        %436 = vmatmul.f32.gmra.mxu0 %v325
        %v437 = vpop.f32.mrf.mxu0
        %v438 = vadd.f32 0.0, %v437
        %439 = vmatmul.f32.gmra.mxu0 %v328
        %v440 = vpop.f32.mrf.mxu0
        %v441 = vadd.f32 0.0, %v440
        %442 = vmatmul.f32.gmra.mxu0 %v331
        %v443 = vpop.f32.mrf.mxu0
        %v444 = vadd.f32 0.0, %v443
        %445 = vmatmul.f32.gmra.mxu0 %v334
        %v446 = vpop.f32.mrf.mxu0
        %v447 = vadd.f32 0.0, %v446
        %448 = vmatmul.f32.gmra.mxu0 %v337
        %v449 = vpop.f32.mrf.mxu0
        %v450 = vadd.f32 0.0, %v449
        %451 = vmatmul.f32.gmra.mxu0 %v340
        %v452 = vpop.f32.mrf.mxu0
        %v453 = vadd.f32 0.0, %v452
        %454 = vmatmul.f32.gmra.mxu0 %v343
        %v455 = vpop.f32.mrf.mxu0
        %v456 = vadd.f32 0.0, %v455
        %457 = vmatmul.f32.gmra.mxu0 %v346
        %v458 = vpop.f32.mrf.mxu0
        %v459 = vadd.f32 0.0, %v458
        %460 = vmatmul.f32.gmra.mxu0 %v349
        %v461 = vpop.f32.mrf.mxu0
        %v462 = vadd.f32 0.0, %v461
        %463 = vmatmul.f32.gmra.mxu0 %v352
        %v464 = vpop.f32.mrf.mxu0
        %v465 = vadd.f32 0.0, %v464
        %466 = vmatmul.f32.gmra.mxu0 %v355
        %v467 = vpop.f32.mrf.mxu0
        %v468 = vadd.f32 0.0, %v467
        %469 = vmatmul.f32.gmra.mxu0 %v358
        %v470 = vpop.f32.mrf.mxu0
        %v471 = vadd.f32 0.0, %v470
        %472 = vmatmul.f32.gmra.mxu0 %v361
        %v473 = vpop.f32.mrf.mxu0
        %v474 = vadd.f32 0.0, %v473
        %475 = vmatmul.f32.gmra.mxu0 %v364
        %v476 = vpop.f32.mrf.mxu0
        %v477 = vadd.f32 0.0, %v476
        %478 = vmatmul.f32.gmra.mxu0 %v367
        %v479 = vpop.f32.mrf.mxu0
        %v480 = vadd.f32 0.0, %v479
        %481 = vmatmul.f32.gmra.mxu0 %v370
        %v482 = vpop.f32.mrf.mxu0
        %v483 = vadd.f32 0.0, %v482
        %484 = vmatmul.f32.gmra.mxu0 %v373
        %v485 = vpop.f32.mrf.mxu0
        %v486 = vadd.f32 0.0, %v485
        %487 = vmatmul.f32.gmra.mxu0 %v376
        %v488 = vpop.f32.mrf.mxu0
        %v489 = vadd.f32 0.0, %v488
        %490 = vmatmul.f32.gmra.mxu0 %v379
        %v491 = vpop.f32.mrf.mxu0
        %v492 = vadd.f32 0.0, %v491
        %493 = vmatmul.f32.gmra.mxu0 %v382
        %v494 = vpop.f32.mrf.mxu0
        %v495 = vadd.f32 0.0, %v494
        %496 = vmatmul.f32.gmra.mxu0 %v385
        %v497 = vpop.f32.mrf.mxu0
        %v498 = vadd.f32 0.0, %v497
        %499 = vdwg.mxu0
        %500 = vxpose.xlu0.b32.start [1/16] %v405, 128
        %501 = vxpose.xlu0.b32.cont [2/16] %v408, 128
        %502 = vxpose.xlu0.b32.cont [3/16] %v411, 128
        %503 = vxpose.xlu0.b32.cont [4/16] %v414, 128
        %504 = vxpose.xlu0.b32.cont [5/16] %v417, 128
        %505 = vxpose.xlu0.b32.cont [6/16] %v420, 128
        %506 = vxpose.xlu0.b32.cont [7/16] %v423, 128
        %507 = vxpose.xlu0.b32.cont [8/16] %v426, 128
        %508 = vxpose.xlu0.b32.cont [9/16] %v429, 128
        %509 = vxpose.xlu0.b32.cont [10/16] %v432, 128
        %510 = vxpose.xlu0.b32.cont [11/16] %v435, 128
        %511 = vxpose.xlu0.b32.cont [12/16] %v438, 128
        %512 = vxpose.xlu0.b32.cont [13/16] %v441, 128
        %513 = vxpose.xlu0.b32.cont [14/16] %v444, 128
        %514 = vxpose.xlu0.b32.cont [15/16] %v447, 128
        %515 = vxpose.xlu0.b32.end [16/16] %v450, 128
        %v516 = vpop.trf.xlu0
        %v517 = vpop.trf.xlu0
        %v518 = vpop.trf.xlu0
        %v519 = vpop.trf.xlu0
        %v520 = vpop.trf.xlu0
        %v521 = vpop.trf.xlu0
        %v522 = vpop.trf.xlu0
        %v523 = vpop.trf.xlu0
        %v524 = vpop.trf.xlu0
        %v525 = vpop.trf.xlu0
        %v526 = vpop.trf.xlu0
        %v527 = vpop.trf.xlu0
        %v528 = vpop.trf.xlu0
        %v529 = vpop.trf.xlu0
        %v530 = vpop.trf.xlu0
        %v531 = vpop.trf.xlu0
        %532 = vxpose.xlu0.b32.start [1/16] %v453, 128
        %533 = vxpose.xlu0.b32.cont [2/16] %v456, 128
        %534 = vxpose.xlu0.b32.cont [3/16] %v459, 128
        %535 = vxpose.xlu0.b32.cont [4/16] %v462, 128
        %536 = vxpose.xlu0.b32.cont [5/16] %v465, 128
        %537 = vxpose.xlu0.b32.cont [6/16] %v468, 128
        %538 = vxpose.xlu0.b32.cont [7/16] %v471, 128
        %539 = vxpose.xlu0.b32.cont [8/16] %v474, 128
        %540 = vxpose.xlu0.b32.cont [9/16] %v477, 128
        %541 = vxpose.xlu0.b32.cont [10/16] %v480, 128
        %542 = vxpose.xlu0.b32.cont [11/16] %v483, 128
        %543 = vxpose.xlu0.b32.cont [12/16] %v486, 128
        %544 = vxpose.xlu0.b32.cont [13/16] %v489, 128
        %545 = vxpose.xlu0.b32.cont [14/16] %v492, 128
        %546 = vxpose.xlu0.b32.cont [15/16] %v495, 128
        %547 = vxpose.xlu0.b32.end [16/16] %v498, 128
        %v548 = vpop.trf.xlu0
        %v549 = vpop.trf.xlu0
        %v550 = vpop.trf.xlu0
        %v551 = vpop.trf.xlu0
        %v552 = vpop.trf.xlu0
        %v553 = vpop.trf.xlu0
        %v554 = vpop.trf.xlu0
        %v555 = vpop.trf.xlu0
        %v556 = vpop.trf.xlu0
        %v557 = vpop.trf.xlu0
        %v558 = vpop.trf.xlu0
        %v559 = vpop.trf.xlu0
        %v560 = vpop.trf.xlu0
        %v561 = vpop.trf.xlu0
        %v562 = vpop.trf.xlu0
        %v563 = vpop.trf.xlu0
        %v564 = vld [vmem:[%s2] sm:$0xff]
        %566 = vset.pattern.permute.xlu0 0
        %567 = vperm.xlu0 %566, %v564
        %v568 = vpop.permute.xlu0 %567
        %v570 = vadd.f32 %v516, %v568
        %v571 = vadd.f32 %v548, %v568
        %v572 = vrot.slane %v570, 4
        %v573 = vadd.f32 %v570, %v572
        %v574 = vrot.slane %v573, 2
        %v575 = vadd.f32 %v573, %v574
        %v576 = vrot.slane %v575, 1
        %v577 = vadd.f32 %v575, %v576
        %v578 = vrot.slane %v571, 4
        %v579 = vadd.f32 %v571, %v578
        %v580 = vrot.slane %v579, 2
        %v581 = vadd.f32 %v579, %v580
        %v582 = vrot.slane %v581, 1
        %v583 = vadd.f32 %v581, %v582
        %v584 = vmul.f32 %v577, 0.125
        %v585 = vmul.f32 %v583, 0.125
        %v586 = vsub.f32 %v570, %v584
        %v587 = vsub.f32 %v571, %v585
        %v588 = vmul.f32 %v586, %v586
        %v589 = vmul.f32 %v587, %v587
        %v590 = vrot.slane %v588, 4
        %v591 = vadd.f32 %v588, %v590
        %v592 = vrot.slane %v591, 2
        %v593 = vadd.f32 %v591, %v592
        %v594 = vrot.slane %v593, 1
        %v595 = vadd.f32 %v593, %v594
        %v596 = vrot.slane %v589, 4
        %v597 = vadd.f32 %v589, %v596
        %v598 = vrot.slane %v597, 2
        %v599 = vadd.f32 %v597, %v598
        %v600 = vrot.slane %v599, 1
        %v601 = vadd.f32 %v599, %v600
        %v602 = vmul.f32 %v595, 0.125
        %v603 = vmul.f32 %v601, 0.125
        %v604 = vadd.f32 %v602, 1e-05
        %v605 = vadd.f32 %v603, 1e-05
        %v606 = vrsqrt.pop %v604
        %v607 = vmul.f32 %v606, %v604
        %v608 = vmul.f32 %v607, %v606
        %v609 = vmul.f32 0.5, %v608
        %v610 = vsub.f32 1.5, %v609
        %v611 = vmul.f32 %v606, %v610
        %vm612 = vweird.f32 %v604
        %vm613 = vweird.f32 %v606
        %vm614 = vmor %vm612, %vm613
        %v615 = vsel %vm614, %v606, %v611
        %v616 = vrsqrt.pop %v605
        %v617 = vmul.f32 %v616, %v605
        %v618 = vmul.f32 %v617, %v616
        %v619 = vmul.f32 0.5, %v618
        %v620 = vsub.f32 1.5, %v619
        %v621 = vmul.f32 %v616, %v620
        %vm622 = vweird.f32 %v605
        %vm623 = vweird.f32 %v616
        %vm624 = vmor %vm622, %vm623
        %v625 = vsel %vm624, %v616, %v621
        %v626 = vmul.f32 %v586, %v615
        %v627 = vmul.f32 %v587, %v625
        %v628 = vld [vmem:[%s3] sm:$0xff]
        %v629 = vld [vmem:[%s4] sm:$0xff]
        %631 = vset.pattern.permute.xlu0 0
        %632 = vperm.xlu0 %631, %v629
        %v633 = vpop.permute.xlu0 %632
        %vm635 = vcmask 64512
        %v637 = vsel %vm635, %v628, 0
        %639 = vmatpush.msra.mxu0 0.0
        %640 = vmatpush.msra.mxu0 0.0
        %641 = vmatpush.msra.mxu0 0.0
        %642 = vmatpush.msra.mxu0 0.0
        %643 = vmatpush.msra.mxu0 0.0
        %644 = vmatpush.msra.mxu0 0.0
        %645 = vmatpush.msra.mxu0 0.0
        %646 = vmatpush.msra.mxu0 0.0
        %647 = vmatpush.msra.mxu0 0.0
        %648 = vmatpush.msra.mxu0 0.0
        %649 = vmatpush.msra.mxu0 0.0
        %650 = vmatpush.msra.mxu0 0.0
        %651 = vmatpush.msra.mxu0 0.0
        %652 = vmatpush.msra.mxu0 0.0
        %653 = vmatpush.msra.mxu0 0.0
        %654 = vmatpush.msra.mxu0 %v626
        %655 = vmatmul.f32.gmra.mxu0 %v637
        %v656 = vpop.f32.mrf.mxu0
        %v657 = vadd.f32 %v633, %v656
        %658 = vdwg.mxu0
        %659 = vmatpush.msra.mxu0 0.0
        %660 = vmatpush.msra.mxu0 0.0
        %661 = vmatpush.msra.mxu0 0.0
        %662 = vmatpush.msra.mxu0 0.0
        %663 = vmatpush.msra.mxu0 0.0
        %664 = vmatpush.msra.mxu0 0.0
        %665 = vmatpush.msra.mxu0 0.0
        %666 = vmatpush.msra.mxu0 0.0
        %667 = vmatpush.msra.mxu0 0.0
        %668 = vmatpush.msra.mxu0 0.0
        %669 = vmatpush.msra.mxu0 0.0
        %670 = vmatpush.msra.mxu0 0.0
        %671 = vmatpush.msra.mxu0 0.0
        %672 = vmatpush.msra.mxu0 0.0
        %673 = vmatpush.msra.mxu0 0.0
        %674 = vmatpush.msra.mxu0 %v627
        %675 = vmatmul.f32.gmra.mxu0 %v637
        %v676 = vpop.f32.mrf.mxu0
        %v677 = vadd.f32 %v633, %v676
        %678 = vdwg.mxu0
        %679 = vst [vmem:[%s242] sm:$0xff] %v657
        %680 = vst [vmem:[%s242 + $0x8] sm:$0xff] %v677
        %s681 = sand.u32 %s153, 1
        %s682 = scalar_lea.sflag [#allocation3], %s681
        %s683 = sand.u32 %s153, 1
        %s684 = smul.addr %s683, 16
        %s685 = scalar_lea.vmem [#allocation2], %s684
        // Predicated region
        $region41: #{tpu_custom_call.1} parent=39 // pred_check
          %p686 = pneg %p163
        $region42: #{tpu_custom_call.1} parent=39 // pred_check_branch
          %688 = sbr.rel (%p686) target = $region44
        $region43: #{tpu_custom_call.1} parent=39 // pred_region
          %s689 = smul.u32 2, %s24
          %691 = vsyncadd %s682, 0
          %s692 = smul.addr %s23, 2
          %s693 = sadd.s32 %s689, %s692
          %s694 = smul.addr %s693, 8
          %s695 = scalar_lea.hbm %s5, %s694
          %s697 = sshll.u32 %s685, 4
          %s698 = int_to_ptr.vmem [resolvable:$true] %s697
          %s699 = sshll.u32 %s695, 4
          %s700 = int_to_ptr.hbm [resolvable:$true] %s699
          %702 = dma.vmem_to_hbm [thread:$0]  %s698, 256, %s700, %s682
        $region44: #{tpu_custom_call.1} parent=39 // pred_fallthru
          _
      $region40: #{tpu_custom_call.1} parent=5 // pred_fallthru
        _
      %p703 = scmp.le.s32.totalorder 2, %s14
      // Predicated region
      $region45: #{tpu_custom_call.1} parent=5 // pred_check
        %p704 = pneg %p703
      $region46: #{tpu_custom_call.1} parent=5 // pred_check_branch
        %706 = sbr.rel (%p704) target = $region48
      $region47: #{tpu_custom_call.1} parent=5 // pred_region
        %s707 = ssub.s32 %s14, 2
        // Predicated region
        $region49: #{tpu_custom_call.1} parent=47 // pred_check
          %p708 = pneg %p169
        $region50: #{tpu_custom_call.1} parent=47 // pred_check_branch
          %710 = sbr.rel (%p708) target = $region52
        $region51: #{tpu_custom_call.1} parent=47 // pred_region
          %s711 = sand.u32 %s154, 1
          %s712 = scalar_lea.sflag [#allocation3], %s711
          %s713 = sand.u32 %s154, 1
          %s714 = smul.addr %s713, 16
          %s715 = scalar_lea.vmem [#allocation2], %s714
          %717 = dma.done %s712, 256
        $region52: #{tpu_custom_call.1} parent=47 // pred_fallthru
          _
      $region48: #{tpu_custom_call.1} parent=5 // pred_fallthru
        _
    $region6: #{tpu_custom_call.1} parent=1 // loop_footer
      %s18 = sadd.s32 1, %s14
    $region7: #{tpu_custom_call.1} parent=1 // loop_footer_branch
      %13 = sbr.rel target = $region3
    $region8: #{tpu_custom_call.1} parent=1 // loop_exit
      _
    %718 = vsyncpa [#allocation3], 1
    %s719 = scalar_lea.sflag [#allocation3], 1
    %720 = vsyncpa %s719, 1

</llo_original>
